<compile_context>
chip_gen: v7x
topology: tpu7x:2x2x1
jax: 0.10.0
libtpu: 0.0.40
codegen_flags: <defaults>
</compile_context>

<pallas_src>
import collections
import functools

import jax
import jax.numpy as jnp
from jax.experimental import pallas as pl
from jax.experimental.pallas import tpu as pltpu


# ----------------------------------------------------------------------------
# helpers
# ----------------------------------------------------------------------------
HWConfig = collections.namedtuple(
    'HWConfig', ['bf16_act', 'max_rows', 'vmem_cap', 'par_split', 'single_buffer'])


def detect_hw():
    """Per-generation tuning knobs (static; decided outside jit)."""
    kind = ''
    try:
        kind = jax.devices()[0].device_kind.lower()
    except Exception:
        pass
    if any(s in kind for s in ('v2', 'v3', 'v4', 'v5 lite', 'v5e', 'v5lite')):
        # v5e-class: no bf16 VPU/EUP -> f32 activations; 1 TC; big tiles.
        return HWConfig(bf16_act=False, max_rows=2048, vmem_cap=100 << 20,
                        par_split=1, single_buffer=True)
    if 'v6' in kind:
        return HWConfig(bf16_act=True, max_rows=2048, vmem_cap=100 << 20,
                        par_split=1, single_buffer=True)
    if 'v7' in kind or '7x' in kind:
        # 64 MiB VMEM, 2 TensorCores -> tighter budget + parallel column split.
        return HWConfig(bf16_act=True, max_rows=1024, vmem_cap=48 << 20,
                        par_split=2, single_buffer=True)
    return HWConfig(bf16_act=True, max_rows=1024, vmem_cap=64 << 20,
                    par_split=1, single_buffer=True)


def _gelu_tanh(x):
    # tanh-approx GELU; runs in x.dtype (bf16 on v6e/v7x, f32 on v5e).
    c = 0.7978845608028654  # sqrt(2/pi)
    return 0.5 * x * (1.0 + jnp.tanh(c * (x + 0.044715 * x * x * x)))


def _round_up(n, m):
    return ((n + m - 1) // m) * m


def _pad_to(x, shape):
    return jnp.pad(x, [(0, s - d) for d, s in zip(x.shape, shape)])


def _choose_tile(n, b, max_rows):
    """Largest tile t dividing n with (t*b) % 8 == 0 and t*b <= max_rows.

    Prefers t < n (so the grid pipelines DMA against compute); falls back to
    the full axis (a full-dim block is always layout-legal)."""
    cands = [t for t in range(1, n + 1)
             if n % t == 0 and (t * b) % 8 == 0 and t * b <= max_rows]
    proper = [t for t in cands if t < n]
    if proper:
        return max(proper)
    if cands:
        return max(cands)
    return n


def _block_spec(shape, index_map, single_buffer=False):
    """BlockSpec; resident blocks get a single buffer when supported."""
    if single_buffer:
        try:
            return pl.BlockSpec(shape, index_map, pipeline_mode=pl.Buffered(1))
        except Exception:  # older jax: no pipeline_mode / Buffered
            pass
    return pl.BlockSpec(shape, index_map)


def _vmem_limit(footprint_bytes, cap):
    return int(min(cap, max(32 << 20, 3 * footprint_bytes)))


# ----------------------------------------------------------------------------
# Pallas kernels (grid = (feature-column blocks [parallel], row tiles [arbitrary]))
# ----------------------------------------------------------------------------
def image_pool_kernel(p_ref, wpe_ref, pool_ref, o_ref, *, bf16_act):
    """p_ref   : [TP*B, Dp_pad]   bf16 patch tile (patch-major rows)
       wpe_ref : [Dp_pad, dv_blk] bf16 patch-embed weight slice (resident)
       pool_ref: [B_pad, TP*B]    bf16 per-tile mean-pool matrix (1/P entries)
       o_ref   : [B_pad, dv_blk]  f32  pooled features (resident accumulator)"""
    step = pl.program_id(1)

    @pl.when(step == 0)
    def _():
        o_ref[...] = jnp.zeros_like(o_ref)

    h = jnp.dot(p_ref[...], wpe_ref[...], preferred_element_type=jnp.float32)
    if bf16_act:
        h = _gelu_tanh(h.astype(jnp.bfloat16))        # bf16 EUP (v6e/v7x)
    else:
        h = _gelu_tanh(h).astype(jnp.bfloat16)         # f32 EUP (v5e)
    o_ref[...] += jnp.dot(pool_ref[...], h, preferred_element_type=jnp.float32)


def text_select_kernel(e_ref, wl_ref, sel_ref, o_ref, *, bf16_act):
    """e_ref   : [TL*B, De_pad]     bf16 token-embedding tile (token-major rows)
       wl_ref  : [De_pad, dt_blk]   bf16 lang linear weight slice (resident)
       sel_ref : [1, B_pad, TL*B]   bf16 per-tile EOT one-hot selection matrix
       o_ref   : [B_pad, dt_blk]    f32  selected-token features (accumulator)"""
    step = pl.program_id(1)

    @pl.when(step == 0)
    def _():
        o_ref[...] = jnp.zeros_like(o_ref)

    h = jnp.dot(e_ref[...], wl_ref[...], preferred_element_type=jnp.float32)
    if bf16_act:
        h = jnp.tanh(h.astype(jnp.bfloat16))
    else:
        h = jnp.tanh(h).astype(jnp.bfloat16)
    o_ref[...] += jnp.dot(sel_ref[0], h, preferred_element_type=jnp.float32)


# ----------------------------------------------------------------------------
# pallas_call wrappers
# ----------------------------------------------------------------------------
def run_image_pool(pf, w_pe, pool, *, tile_rows, b_pad, col_blk, hw):
    pb, dp_pad = pf.shape
    dv_pad = w_pe.shape[1]
    n_steps = pb // tile_rows
    n_par = dv_pad // col_blk
    footprint = (2 * tile_rows * dp_pad * 2      # double-buffered stream tile
                 + 2 * dp_pad * col_blk * 2      # weight slice
                 + b_pad * tile_rows * 2         # pool matrix
                 + 2 * b_pad * col_blk * 4)      # output block
    kernel = functools.partial(image_pool_kernel, bf16_act=hw.bf16_act)
    return pl.pallas_call(
        kernel,
        out_shape=jax.ShapeDtypeStruct((b_pad, dv_pad), jnp.float32),
        grid=(n_par, n_steps),
        in_specs=[
            pl.BlockSpec((tile_rows, dp_pad), lambda d, s: (s, 0)),
            _block_spec((dp_pad, col_blk), lambda d, s: (0, d),
                        single_buffer=hw.single_buffer and n_par == 1),
            _block_spec((b_pad, tile_rows), lambda d, s: (0, 0),
                        single_buffer=hw.single_buffer),
        ],
        out_specs=pl.BlockSpec((b_pad, col_blk), lambda d, s: (0, d)),
        compiler_params=pltpu.CompilerParams(
            dimension_semantics=("parallel", "arbitrary"),
            vmem_limit_bytes=_vmem_limit(footprint, hw.vmem_cap)),
    )(pf, w_pe, pool)


def run_text_select(ef, w_lang, sel, *, tile_rows, b_pad, col_blk, hw):
    lb, de_pad = ef.shape
    dt_pad = w_lang.shape[1]
    n_steps = lb // tile_rows
    n_par = dt_pad // col_blk
    footprint = (2 * tile_rows * de_pad * 2
                 + 2 * de_pad * col_blk * 2
                 + 2 * b_pad * tile_rows * 2
                 + 2 * b_pad * col_blk * 4)
    kernel = functools.partial(text_select_kernel, bf16_act=hw.bf16_act)
    return pl.pallas_call(
        kernel,
        out_shape=jax.ShapeDtypeStruct((b_pad, dt_pad), jnp.float32),
        grid=(n_par, n_steps),
        in_specs=[
            pl.BlockSpec((tile_rows, de_pad), lambda d, s: (s, 0)),
            _block_spec((de_pad, col_blk), lambda d, s: (0, d),
                        single_buffer=hw.single_buffer and n_par == 1),
            pl.BlockSpec((1, b_pad, tile_rows), lambda d, s: (s, 0, 0)),
        ],
        out_specs=pl.BlockSpec((b_pad, col_blk), lambda d, s: (0, d)),
        compiler_params=pltpu.CompilerParams(
            dimension_semantics=("parallel", "arbitrary"),
            vmem_limit_bytes=_vmem_limit(footprint, hw.vmem_cap)),
    )(ef, w_lang, sel)


# ----------------------------------------------------------------------------
# glue: single-write streamed tensors
# ----------------------------------------------------------------------------
def extract_patches(image_nchw, patch):
    """NCHW -> [B, P, C*patch*patch] (reference path only)."""
    B, C, H, W = image_nchw.shape
    x = image_nchw.reshape(B, C, H // patch, patch, W // patch, patch)
    x = jnp.transpose(x, (0, 2, 4, 1, 3, 5))
    return x.reshape(B, (H // patch) * (W // patch), C * patch * patch)


def extract_patches_flat(image_nchw, patch, dp_pad):
    """NCHW -> [P*B, Dp_pad] bf16, patch-major rows, written once."""
    B, C, H, W = image_nchw.shape
    hp, wp = H // patch, W // patch
    dp = C * patch * patch
    x = image_nchw.reshape(B, C, hp, patch, wp, patch)
    x = jnp.transpose(x, (2, 4, 0, 1, 3, 5))            # [hp, wp, B, C, ph, pw]
    x = x.reshape(hp * wp * B, dp)                       # row = p*B + b
    if dp_pad > dp:
        x = jnp.pad(x, ((0, 0), (0, dp_pad - dp)))
    return x.astype(jnp.bfloat16)


# ----------------------------------------------------------------------------
# UniCLModel forward
# ----------------------------------------------------------------------------
@functools.partial(jax.jit, static_argnames=('patch', 'tokenizer', 'hw'))
def unicl_forward(params, image, input_ids, patch=4, tokenizer='clip',
                  hw=HWConfig(True, 1024, 64 << 20, 1, True)):
    B = image.shape[0]
    B_pad = _round_up(B, 8)

    # ---------------- encode_image ----------------
    C, H, W = image.shape[1:]
    P = (H // patch) * (W // patch)
    Dp = C * patch * patch
    Dp_pad = _round_up(Dp, 128)
    w_pe = params['w_patch_embed']                           # [Dp, Dv]
    Dv = w_pe.shape[1]
    Dv_pad = _round_up(Dv, 128)

    pf = extract_patches_flat(image.astype(jnp.float32), patch, Dp_pad)
    w_pe_p = _pad_to(w_pe, (Dp_pad, Dv_pad)).astype(jnp.bfloat16)

    rows_cap = max(8, min(hw.max_rows, (hw.vmem_cap // 4) // (Dp_pad * 4)))
    TP = _choose_tile(P, B, rows_cap)
    tile_rows = TP * B
    # per-tile mean-pool matrix: pool[b, t*B + b] = 1/P
    cols = jnp.arange(tile_rows)
    pool = ((cols[None, :] % B) == jnp.arange(B_pad)[:, None])
    pool = (pool.astype(jnp.float32) / P).astype(jnp.bfloat16)

    dv_blk = Dv_pad
    if hw.par_split > 1 and Dv_pad % (128 * hw.par_split) == 0:
        dv_blk = Dv_pad // hw.par_split

    pooled = run_image_pool(pf, w_pe_p, pool, tile_rows=tile_rows,
                            b_pad=B_pad, col_blk=dv_blk, hw=hw)[:B, :Dv]
    xi = pooled @ params['image_projection']                 # tiny, f32 XLA
    features_image = xi / jnp.linalg.norm(xi, axis=-1, keepdims=True)

    # ---------------- encode_text ----------------
    # TODO(synk): real UniCL uses external Swin/FocalNet and transformer
    # encoders; synthetic encoders (patch-embed+GELU+pool / embed+linear+tanh)
    # stand in for them here.
    L = input_ids.shape[1]
    De = params['token_embedding'].shape[1]
    De_pad = _round_up(De, 128)
    emb_tbl = _pad_to(params['token_embedding'],
                      (params['token_embedding'].shape[0], De_pad)).astype(jnp.bfloat16)
    # token-major gather -> [L*B, De_pad] bf16, written once
    ef = jnp.take(emb_tbl, jnp.transpose(input_ids).reshape(-1), axis=0)

    w_ln = params['w_lang_linear']                           # [De, Dt]
    Dt = w_ln.shape[1]
    Dt_pad = _round_up(Dt, 128)
    w_ln_p = _pad_to(w_ln, (De_pad, Dt_pad)).astype(jnp.bfloat16)

    rows_cap_t = max(8, min(hw.max_rows, (hw.vmem_cap // 4) // (De_pad * 4)))
    TL = _choose_tile(L, B, rows_cap_t)
    nL = L // TL
    tile_rows_t = TL * B

    # EOT-token ('clip': argmax of ids) / first-token selection as per-tile
    # one-hot matrices -> the gather is a tiny MXU matmul in-kernel.
    if tokenizer == 'clip':
        eot_idx = jnp.argmax(input_ids, axis=-1)             # [B]
    else:
        eot_idx = jnp.zeros((B,), jnp.int32)
    row_in_tile = (eot_idx % TL) * B + jnp.arange(B)
    sel_rows = jax.nn.one_hot(row_in_tile, tile_rows_t, dtype=jnp.float32)
    tile_mask = (eot_idx // TL)[:, None] == jnp.arange(nL)[None, :]
    sel = sel_rows[:, None, :] * tile_mask[:, :, None].astype(jnp.float32)
    sel = jnp.transpose(sel, (1, 0, 2))                      # [nL, B, TL*B]
    sel = _pad_to(sel, (nL, B_pad, tile_rows_t)).astype(jnp.bfloat16)

    dt_blk = Dt_pad
    if hw.par_split > 1 and Dt_pad % (128 * hw.par_split) == 0:
        dt_blk = Dt_pad // hw.par_split

    selected = run_text_select(ef, w_ln_p, sel, tile_rows=tile_rows_t,
                               b_pad=B_pad, col_blk=dt_blk, hw=hw)[:B, :Dt]
    xt = selected @ params['lang_projection']
    features_text = xt / jnp.linalg.norm(xt, axis=-1, keepdims=True)

    # ---------------- temperature ----------------
    T = jnp.exp(params['logit_scale'])
    return features_image, features_text, T


# ----------------------------------------------------------------------------
# pure-JAX f32 reference (same forward semantics)
# ----------------------------------------------------------------------------
def reference_forward(params, image, input_ids, patch, tokenizer='clip'):
    patches = extract_patches(image.astype(jnp.float32), patch)
    h = _gelu_tanh(jnp.einsum('bpd,de->bpe', patches, params['w_patch_embed']))
    x = jnp.mean(h, axis=1) @ params['image_projection']
    fi = x / jnp.linalg.norm(x, axis=-1, keepdims=True)

    emb = jnp.take(params['token_embedding'], input_ids, axis=0)
    lh = jnp.tanh(jnp.einsum('bld,de->ble', emb, params['w_lang_linear']))
    if tokenizer == 'clip':
        idx = jnp.argmax(input_ids, axis=-1)
        tx = jnp.take_along_axis(lh, idx[:, None, None], axis=1)[:, 0]
    else:
        tx = lh[:, 0]
    y = tx @ params['lang_projection']
    ft = y / jnp.linalg.norm(y, axis=-1, keepdims=True)
    return fi, ft, jnp.exp(params['logit_scale'])


def init_params(key, *, c, patch, dim_img, dim_lang, vocab, dim_proj):
    ks = jax.random.split(key, 5)
    patch_dim = c * patch * patch
    std = 0.02
    return {
        'w_patch_embed': jax.random.normal(ks[0], (patch_dim, dim_img), jnp.float32) * std,
        'token_embedding': jax.random.normal(ks[1], (vocab, dim_lang), jnp.float32) * std,
        'w_lang_linear': jax.random.normal(ks[2], (dim_lang, dim_lang), jnp.float32) * std,
        'image_projection': jax.random.normal(ks[3], (dim_img, dim_proj), jnp.float32) * std,
        'lang_projection': jax.random.normal(ks[4], (dim_lang, dim_proj), jnp.float32) * std,
        'logit_scale': jnp.ones((), jnp.float32),
    }


if __name__ == "__main__":
    key = jax.random.PRNGKey(0)
    k_img, k_txt, k_par = jax.random.split(key, 3)

    B, C, H, W = 2, 4, 16, 16
    L = 8
    PATCH = 4
    DIM_IMG = 32    # image_encoder.dim_out
    DIM_LANG = 32   # lang_encoder.dim_out
    VOCAB = 64
    DIM_PROJ = 32   # config['UNICL_MODEL']['DIM_PROJECTION']

    image = jax.random.normal(k_img, (B, C, H, W), jnp.float32)
    input_ids = jax.random.randint(k_txt, (B, L), 0, VOCAB, jnp.int32)

    params = init_params(k_par, c=C, patch=PATCH, dim_img=DIM_IMG,
                         dim_lang=DIM_LANG, vocab=VOCAB, dim_proj=DIM_PROJ)

    hw = detect_hw()
    try:
        feats_img, feats_txt, T = unicl_forward(params, image, input_ids,
                                                patch=PATCH, tokenizer='clip', hw=hw)
        jax.block_until_ready((feats_img, feats_txt, T))
    except Exception:
        # Fallback: disable single-buffered resident blocks (e.g. if this jax
        # build rejects pl.Buffered(1)); identical semantics.
        hw = hw._replace(single_buffer=False)
        feats_img, feats_txt, T = unicl_forward(params, image, input_ids,
                                                patch=PATCH, tokenizer='clip', hw=hw)
        jax.block_until_ready((feats_img, feats_txt, T))

    ref_img, ref_txt, ref_T = reference_forward(params, image, input_ids, PATCH)

    # shape / normalization / numerical sanity (bf16 MXU inputs, f32 accumulate)
    assert feats_img.shape == (B, DIM_PROJ)
    assert feats_txt.shape == (B, DIM_PROJ)
    assert T.shape == ()
    assert jnp.allclose(jnp.linalg.norm(feats_img, axis=-1), 1.0, atol=1e-4)
    assert jnp.allclose(jnp.linalg.norm(feats_txt, axis=-1), 1.0, atol=1e-4)
    assert float(jnp.max(jnp.abs(feats_img - ref_img))) < 5e-2
    assert float(jnp.max(jnp.abs(feats_txt - ref_txt))) < 5e-2
    assert jnp.allclose(T, ref_T)

    print("KERNEL_OK")
</pallas_src>

<mosaic_0001>
module attributes {stable_mosaic.version = 11 : i64} {
  func.func @text_select_kernel(%arg0: i32, %arg1: i32, %arg2: memref<8x128xbf16, #tpu.memory_space<vmem>>, %arg3: memref<128x128xbf16, #tpu.memory_space<vmem>>, %arg4: memref<1x8x8xbf16, #tpu.memory_space<vmem>>, %arg5: memref<8x128xf32, #tpu.memory_space<vmem>>) attributes {dimension_semantics = [#tpu.dimension_semantics<parallel>, #tpu.dimension_semantics<arbitrary>], iteration_bounds = array<i64: 1, 2>, scalar_prefetch = 0 : i64, scratch_operands = 0 : i64, tpu.core_type = #tpu.core_type<tc>, window_params = [{transform_indices = @transform_0, window_bounds = array<i64: 8, 128>}, {pipeline_mode = #tpu.pipeline_mode<synchronous>, transform_indices = @transform_1, window_bounds = array<i64: 128, 128>}, {transform_indices = @transform_2, window_bounds = array<i64: 1, 8, 8>}, {transform_indices = @transform_3, window_bounds = array<i64: 8, 128>}]} {
    %c0_i32 = arith.constant 0 : i32
    %0 = arith.cmpi eq, %arg1, %c0_i32 : i32
    %1 = arith.extui %0 : i1 to i32
    %c0_i32_0 = arith.constant 0 : i32
    %2 = arith.cmpi ne, %1, %c0_i32_0 : i32
    scf.if %2 {
      %cst_12 = arith.constant 0.000000e+00 : f32
      %14 = vector.broadcast %cst_12 : f32 to vector<8x128xf32>
      %c0_13 = arith.constant 0 : index
      %c0_14 = arith.constant 0 : index
      %15 = vector.load %arg5[%c0_13, %c0_14] : memref<8x128xf32, #tpu.memory_space<vmem>>, vector<8x128xf32>
      tpu.vector_store %arg5[%c0_13, %c0_14], %14 {strides = array<i32>} : memref<8x128xf32, #tpu.memory_space<vmem>>, vector<8x128xf32>,
    } else {
    }
    %c0 = arith.constant 0 : index
    %c0_1 = arith.constant 0 : index
    %3 = vector.load %arg2[%c0, %c0_1] : memref<8x128xbf16, #tpu.memory_space<vmem>>, vector<8x128xbf16>
    %c0_2 = arith.constant 0 : index
    %c0_3 = arith.constant 0 : index
    %4 = vector.load %arg3[%c0_2, %c0_3] : memref<128x128xbf16, #tpu.memory_space<vmem>>, vector<128x128xbf16>
    %cst = arith.constant dense<0.000000e+00> : vector<8x128xf32>
    %5 = tpu.matmul %3, %4, %cst {dimension_numbers = #tpu.dot_dimension_numbers<[1], [0], [0], [1], [0, 0, 1, 1], [], []>} : vector<8x128xbf16>, vector<128x128xbf16>, vector<8x128xf32> -> vector<8x128xf32>
    %6 = arith.truncf %5 : vector<8x128xf32> to vector<8x128xbf16>
    %7 = math.tanh %6 : vector<8x128xbf16>
    %c0_4 = arith.constant 0 : index
    %c0_5 = arith.constant 0 : index
    %8 = vector.load %arg5[%c0_4, %c0_5] : memref<8x128xf32, #tpu.memory_space<vmem>>, vector<8x128xf32>
    %c0_6 = arith.constant 0 : index
    %c0_7 = arith.constant 0 : index
    %c0_8 = arith.constant 0 : index
    %9 = vector.load %arg4[%c0_6, %c0_7, %c0_8] : memref<1x8x8xbf16, #tpu.memory_space<vmem>>, vector<1x8x8xbf16>
    %10 = vector.shape_cast %9 : vector<1x8x8xbf16> to vector<8x8xbf16>
    %cst_9 = arith.constant dense<0.000000e+00> : vector<8x128xf32>
    %11 = tpu.matmul %10, %7, %cst_9 {dimension_numbers = #tpu.dot_dimension_numbers<[1], [0], [0], [1], [0, 0, 1, 1], [], []>} : vector<8x8xbf16>, vector<8x128xbf16>, vector<8x128xf32> -> vector<8x128xf32>
    %12 = arith.addf %8, %11 : vector<8x128xf32>
    %c0_10 = arith.constant 0 : index
    %c0_11 = arith.constant 0 : index
    %13 = vector.load %arg5[%c0_10, %c0_11] : memref<8x128xf32, #tpu.memory_space<vmem>>, vector<8x128xf32>
    tpu.vector_store %arg5[%c0_10, %c0_11], %12 {strides = array<i32>} : memref<8x128xf32, #tpu.memory_space<vmem>>, vector<8x128xf32>,
    return
  }
  func.func @transform_0(%arg0: i32, %arg1: i32) -> (i32, i32) {
    %c0_i32 = arith.constant 0 : i32
    %c0_i32_0 = arith.constant 0 : i32
    return %arg1, %c0_i32 : i32, i32
  }
  func.func @transform_1(%arg0: i32, %arg1: i32) -> (i32, i32) {
    %c0_i32 = arith.constant 0 : i32
    %c0_i32_0 = arith.constant 0 : i32
    return %c0_i32, %arg0 : i32, i32
  }
  func.func @transform_2(%arg0: i32, %arg1: i32) -> (i32, i32, i32) {
    %c0_i32 = arith.constant 0 : i32
    %c0_i32_0 = arith.constant 0 : i32
    %c0_i32_1 = arith.constant 0 : i32
    return %arg1, %c0_i32, %c0_i32_0 : i32, i32, i32
  }
  func.func @transform_3(%arg0: i32, %arg1: i32) -> (i32, i32) {
    %c0_i32 = arith.constant 0 : i32
    %c0_i32_0 = arith.constant 0 : i32
    return %c0_i32, %arg0 : i32, i32
  }
}

module attributes {stable_mosaic.version = 11 : i64} {
  func.func @image_pool_kernel(%arg0: i32, %arg1: i32, %arg2: memref<16x128xbf16, #tpu.memory_space<vmem>>, %arg3: memref<128x128xbf16, #tpu.memory_space<vmem>>, %arg4: memref<8x16xbf16, #tpu.memory_space<vmem>>, %arg5: memref<8x128xf32, #tpu.memory_space<vmem>>) attributes {dimension_semantics = [#tpu.dimension_semantics<parallel>, #tpu.dimension_semantics<arbitrary>], iteration_bounds = array<i64: 1, 2>, scalar_prefetch = 0 : i64, scratch_operands = 0 : i64, tpu.core_type = #tpu.core_type<tc>, window_params = [{transform_indices = @transform_0, window_bounds = array<i64: 16, 128>}, {pipeline_mode = #tpu.pipeline_mode<synchronous>, transform_indices = @transform_1, window_bounds = array<i64: 128, 128>}, {pipeline_mode = #tpu.pipeline_mode<synchronous>, transform_indices = @transform_2, window_bounds = array<i64: 8, 16>}, {transform_indices = @transform_3, window_bounds = array<i64: 8, 128>}]} {
    %c0_i32 = arith.constant 0 : i32
    %0 = arith.cmpi eq, %arg1, %c0_i32 : i32
    %1 = arith.extui %0 : i1 to i32
    %c0_i32_0 = arith.constant 0 : i32
    %2 = arith.cmpi ne, %1, %c0_i32_0 : i32
    scf.if %2 {
      %cst_15 = arith.constant 0.000000e+00 : f32
      %25 = vector.broadcast %cst_15 : f32 to vector<8x128xf32>
      %c0_16 = arith.constant 0 : index
      %c0_17 = arith.constant 0 : index
      %26 = vector.load %arg5[%c0_16, %c0_17] : memref<8x128xf32, #tpu.memory_space<vmem>>, vector<8x128xf32>
      tpu.vector_store %arg5[%c0_16, %c0_17], %25 {strides = array<i32>} : memref<8x128xf32, #tpu.memory_space<vmem>>, vector<8x128xf32>,
    } else {
    }
    %c0 = arith.constant 0 : index
    %c0_1 = arith.constant 0 : index
    %3 = vector.load %arg2[%c0, %c0_1] : memref<16x128xbf16, #tpu.memory_space<vmem>>, vector<16x128xbf16>
    %c0_2 = arith.constant 0 : index
    %c0_3 = arith.constant 0 : index
    %4 = vector.load %arg3[%c0_2, %c0_3] : memref<128x128xbf16, #tpu.memory_space<vmem>>, vector<128x128xbf16>
    %cst = arith.constant dense<0.000000e+00> : vector<16x128xf32>
    %5 = tpu.matmul %3, %4, %cst {dimension_numbers = #tpu.dot_dimension_numbers<[1], [0], [0], [1], [0, 0, 1, 1], [], []>} : vector<16x128xbf16>, vector<128x128xbf16>, vector<16x128xf32> -> vector<16x128xf32>
    %6 = arith.truncf %5 : vector<16x128xf32> to vector<16x128xbf16>
    %cst_4 = arith.constant 5.000000e-01 : bf16
    %7 = vector.broadcast %cst_4 : bf16 to vector<16x128xbf16>
    %8 = arith.mulf %7, %6 : vector<16x128xbf16>
    %cst_5 = arith.constant 4.467770e-02 : bf16
    %9 = vector.broadcast %cst_5 : bf16 to vector<16x128xbf16>
    %10 = arith.mulf %9, %6 : vector<16x128xbf16>
    %11 = arith.mulf %10, %6 : vector<16x128xbf16>
    %12 = arith.mulf %11, %6 : vector<16x128xbf16>
    %13 = arith.addf %6, %12 : vector<16x128xbf16>
    %cst_6 = arith.constant 7.968750e-01 : bf16
    %14 = vector.broadcast %cst_6 : bf16 to vector<16x128xbf16>
    %15 = arith.mulf %14, %13 : vector<16x128xbf16>
    %16 = math.tanh %15 : vector<16x128xbf16>
    %cst_7 = arith.constant 1.000000e+00 : bf16
    %17 = vector.broadcast %cst_7 : bf16 to vector<16x128xbf16>
    %18 = arith.addf %17, %16 : vector<16x128xbf16>
    %19 = arith.mulf %8, %18 : vector<16x128xbf16>
    %c0_8 = arith.constant 0 : index
    %c0_9 = arith.constant 0 : index
    %20 = vector.load %arg5[%c0_8, %c0_9] : memref<8x128xf32, #tpu.memory_space<vmem>>, vector<8x128xf32>
    %c0_10 = arith.constant 0 : index
    %c0_11 = arith.constant 0 : index
    %21 = vector.load %arg4[%c0_10, %c0_11] : memref<8x16xbf16, #tpu.memory_space<vmem>>, vector<8x16xbf16>
    %cst_12 = arith.constant dense<0.000000e+00> : vector<8x128xf32>
    %22 = tpu.matmul %21, %19, %cst_12 {dimension_numbers = #tpu.dot_dimension_numbers<[1], [0], [0], [1], [0, 0, 1, 1], [], []>} : vector<8x16xbf16>, vector<16x128xbf16>, vector<8x128xf32> -> vector<8x128xf32>
    %23 = arith.addf %20, %22 : vector<8x128xf32>
    %c0_13 = arith.constant 0 : index
    %c0_14 = arith.constant 0 : index
    %24 = vector.load %arg5[%c0_13, %c0_14] : memref<8x128xf32, #tpu.memory_space<vmem>>, vector<8x128xf32>
    tpu.vector_store %arg5[%c0_13, %c0_14], %23 {strides = array<i32>} : memref<8x128xf32, #tpu.memory_space<vmem>>, vector<8x128xf32>,
    return
  }
  func.func @transform_0(%arg0: i32, %arg1: i32) -> (i32, i32) {
    %c0_i32 = arith.constant 0 : i32
    %c0_i32_0 = arith.constant 0 : i32
    return %arg1, %c0_i32 : i32, i32
  }
  func.func @transform_1(%arg0: i32, %arg1: i32) -> (i32, i32) {
    %c0_i32 = arith.constant 0 : i32
    %c0_i32_0 = arith.constant 0 : i32
    return %c0_i32, %arg0 : i32, i32
  }
  func.func @transform_2(%arg0: i32, %arg1: i32) -> (i32, i32) {
    %c0_i32 = arith.constant 0 : i32
    %c0_i32_0 = arith.constant 0 : i32
    %c0_i32_1 = arith.constant 0 : i32
    return %c0_i32, %c0_i32_0 : i32, i32
  }
  func.func @transform_3(%arg0: i32, %arg1: i32) -> (i32, i32) {
    %c0_i32 = arith.constant 0 : i32
    %c0_i32_0 = arith.constant 0 : i32
    return %c0_i32, %arg0 : i32, i32
  }
}

module attributes {stable_mosaic.version = 11 : i64} {
  func.func @text_select_kernel(%arg0: i32, %arg1: i32, %arg2: memref<8x128xbf16, #tpu.memory_space<vmem>>, %arg3: memref<128x128xbf16, #tpu.memory_space<vmem>>, %arg4: memref<1x8x8xbf16, #tpu.memory_space<vmem>>, %arg5: memref<8x128xf32, #tpu.memory_space<vmem>>) attributes {dimension_semantics = [#tpu.dimension_semantics<parallel>, #tpu.dimension_semantics<arbitrary>], iteration_bounds = array<i64: 1, 2>, scalar_prefetch = 0 : i64, scratch_operands = 0 : i64, tpu.core_type = #tpu.core_type<tc>, window_params = [{transform_indices = @transform_0, window_bounds = array<i64: 8, 128>}, {transform_indices = @transform_1, window_bounds = array<i64: 128, 128>}, {transform_indices = @transform_2, window_bounds = array<i64: 1, 8, 8>}, {transform_indices = @transform_3, window_bounds = array<i64: 8, 128>}]} {
    %c0_i32 = arith.constant 0 : i32
    %0 = arith.cmpi eq, %arg1, %c0_i32 : i32
    %1 = arith.extui %0 : i1 to i32
    %c0_i32_0 = arith.constant 0 : i32
    %2 = arith.cmpi ne, %1, %c0_i32_0 : i32
    scf.if %2 {
      %cst_12 = arith.constant 0.000000e+00 : f32
      %14 = vector.broadcast %cst_12 : f32 to vector<8x128xf32>
      %c0_13 = arith.constant 0 : index
      %c0_14 = arith.constant 0 : index
      %15 = vector.load %arg5[%c0_13, %c0_14] : memref<8x128xf32, #tpu.memory_space<vmem>>, vector<8x128xf32>
      tpu.vector_store %arg5[%c0_13, %c0_14], %14 {strides = array<i32>} : memref<8x128xf32, #tpu.memory_space<vmem>>, vector<8x128xf32>,
    } else {
    }
    %c0 = arith.constant 0 : index
    %c0_1 = arith.constant 0 : index
    %3 = vector.load %arg2[%c0, %c0_1] : memref<8x128xbf16, #tpu.memory_space<vmem>>, vector<8x128xbf16>
    %c0_2 = arith.constant 0 : index
    %c0_3 = arith.constant 0 : index
    %4 = vector.load %arg3[%c0_2, %c0_3] : memref<128x128xbf16, #tpu.memory_space<vmem>>, vector<128x128xbf16>
    %cst = arith.constant dense<0.000000e+00> : vector<8x128xf32>
    %5 = tpu.matmul %3, %4, %cst {dimension_numbers = #tpu.dot_dimension_numbers<[1], [0], [0], [1], [0, 0, 1, 1], [], []>} : vector<8x128xbf16>, vector<128x128xbf16>, vector<8x128xf32> -> vector<8x128xf32>
    %6 = arith.truncf %5 : vector<8x128xf32> to vector<8x128xbf16>
    %7 = math.tanh %6 : vector<8x128xbf16>
    %c0_4 = arith.constant 0 : index
    %c0_5 = arith.constant 0 : index
    %8 = vector.load %arg5[%c0_4, %c0_5] : memref<8x128xf32, #tpu.memory_space<vmem>>, vector<8x128xf32>
    %c0_6 = arith.constant 0 : index
    %c0_7 = arith.constant 0 : index
    %c0_8 = arith.constant 0 : index
    %9 = vector.load %arg4[%c0_6, %c0_7, %c0_8] : memref<1x8x8xbf16, #tpu.memory_space<vmem>>, vector<1x8x8xbf16>
    %10 = vector.shape_cast %9 : vector<1x8x8xbf16> to vector<8x8xbf16>
    %cst_9 = arith.constant dense<0.000000e+00> : vector<8x128xf32>
    %11 = tpu.matmul %10, %7, %cst_9 {dimension_numbers = #tpu.dot_dimension_numbers<[1], [0], [0], [1], [0, 0, 1, 1], [], []>} : vector<8x8xbf16>, vector<8x128xbf16>, vector<8x128xf32> -> vector<8x128xf32>
    %12 = arith.addf %8, %11 : vector<8x128xf32>
    %c0_10 = arith.constant 0 : index
    %c0_11 = arith.constant 0 : index
    %13 = vector.load %arg5[%c0_10, %c0_11] : memref<8x128xf32, #tpu.memory_space<vmem>>, vector<8x128xf32>
    tpu.vector_store %arg5[%c0_10, %c0_11], %12 {strides = array<i32>} : memref<8x128xf32, #tpu.memory_space<vmem>>, vector<8x128xf32>,
    return
  }
  func.func @transform_0(%arg0: i32, %arg1: i32) -> (i32, i32) {
    %c0_i32 = arith.constant 0 : i32
    %c0_i32_0 = arith.constant 0 : i32
    return %arg1, %c0_i32 : i32, i32
  }
  func.func @transform_1(%arg0: i32, %arg1: i32) -> (i32, i32) {
    %c0_i32 = arith.constant 0 : i32
    %c0_i32_0 = arith.constant 0 : i32
    return %c0_i32, %arg0 : i32, i32
  }
  func.func @transform_2(%arg0: i32, %arg1: i32) -> (i32, i32, i32) {
    %c0_i32 = arith.constant 0 : i32
    %c0_i32_0 = arith.constant 0 : i32
    %c0_i32_1 = arith.constant 0 : i32
    return %arg1, %c0_i32, %c0_i32_0 : i32, i32, i32
  }
  func.func @transform_3(%arg0: i32, %arg1: i32) -> (i32, i32) {
    %c0_i32 = arith.constant 0 : i32
    %c0_i32_0 = arith.constant 0 : i32
    return %c0_i32, %arg0 : i32, i32
  }
}

module attributes {stable_mosaic.version = 11 : i64} {
  func.func @image_pool_kernel(%arg0: i32, %arg1: i32, %arg2: memref<16x128xbf16, #tpu.memory_space<vmem>>, %arg3: memref<128x128xbf16, #tpu.memory_space<vmem>>, %arg4: memref<8x16xbf16, #tpu.memory_space<vmem>>, %arg5: memref<8x128xf32, #tpu.memory_space<vmem>>) attributes {dimension_semantics = [#tpu.dimension_semantics<parallel>, #tpu.dimension_semantics<arbitrary>], iteration_bounds = array<i64: 1, 2>, scalar_prefetch = 0 : i64, scratch_operands = 0 : i64, tpu.core_type = #tpu.core_type<tc>, window_params = [{transform_indices = @transform_0, window_bounds = array<i64: 16, 128>}, {transform_indices = @transform_1, window_bounds = array<i64: 128, 128>}, {pipeline_mode = #tpu.pipeline_mode<synchronous>, transform_indices = @transform_2, window_bounds = array<i64: 8, 16>}, {transform_indices = @transform_3, window_bounds = array<i64: 8, 128>}]} {
    %c0_i32 = arith.constant 0 : i32
    %0 = arith.cmpi eq, %arg1, %c0_i32 : i32
    %1 = arith.extui %0 : i1 to i32
    %c0_i32_0 = arith.constant 0 : i32
    %2 = arith.cmpi ne, %1, %c0_i32_0 : i32
    scf.if %2 {
      %cst_15 = arith.constant 0.000000e+00 : f32
      %25 = vector.broadcast %cst_15 : f32 to vector<8x128xf32>
      %c0_16 = arith.constant 0 : index
      %c0_17 = arith.constant 0 : index
      %26 = vector.load %arg5[%c0_16, %c0_17] : memref<8x128xf32, #tpu.memory_space<vmem>>, vector<8x128xf32>
      tpu.vector_store %arg5[%c0_16, %c0_17], %25 {strides = array<i32>} : memref<8x128xf32, #tpu.memory_space<vmem>>, vector<8x128xf32>,
    } else {
    }
    %c0 = arith.constant 0 : index
    %c0_1 = arith.constant 0 : index
    %3 = vector.load %arg2[%c0, %c0_1] : memref<16x128xbf16, #tpu.memory_space<vmem>>, vector<16x128xbf16>
    %c0_2 = arith.constant 0 : index
    %c0_3 = arith.constant 0 : index
    %4 = vector.load %arg3[%c0_2, %c0_3] : memref<128x128xbf16, #tpu.memory_space<vmem>>, vector<128x128xbf16>
    %cst = arith.constant dense<0.000000e+00> : vector<16x128xf32>
    %5 = tpu.matmul %3, %4, %cst {dimension_numbers = #tpu.dot_dimension_numbers<[1], [0], [0], [1], [0, 0, 1, 1], [], []>} : vector<16x128xbf16>, vector<128x128xbf16>, vector<16x128xf32> -> vector<16x128xf32>
    %6 = arith.truncf %5 : vector<16x128xf32> to vector<16x128xbf16>
    %cst_4 = arith.constant 5.000000e-01 : bf16
    %7 = vector.broadcast %cst_4 : bf16 to vector<16x128xbf16>
    %8 = arith.mulf %7, %6 : vector<16x128xbf16>
    %cst_5 = arith.constant 4.467770e-02 : bf16
    %9 = vector.broadcast %cst_5 : bf16 to vector<16x128xbf16>
    %10 = arith.mulf %9, %6 : vector<16x128xbf16>
    %11 = arith.mulf %10, %6 : vector<16x128xbf16>
    %12 = arith.mulf %11, %6 : vector<16x128xbf16>
    %13 = arith.addf %6, %12 : vector<16x128xbf16>
    %cst_6 = arith.constant 7.968750e-01 : bf16
    %14 = vector.broadcast %cst_6 : bf16 to vector<16x128xbf16>
    %15 = arith.mulf %14, %13 : vector<16x128xbf16>
    %16 = math.tanh %15 : vector<16x128xbf16>
    %cst_7 = arith.constant 1.000000e+00 : bf16
    %17 = vector.broadcast %cst_7 : bf16 to vector<16x128xbf16>
    %18 = arith.addf %17, %16 : vector<16x128xbf16>
    %19 = arith.mulf %8, %18 : vector<16x128xbf16>
    %c0_8 = arith.constant 0 : index
    %c0_9 = arith.constant 0 : index
    %20 = vector.load %arg5[%c0_8, %c0_9] : memref<8x128xf32, #tpu.memory_space<vmem>>, vector<8x128xf32>
    %c0_10 = arith.constant 0 : index
    %c0_11 = arith.constant 0 : index
    %21 = vector.load %arg4[%c0_10, %c0_11] : memref<8x16xbf16, #tpu.memory_space<vmem>>, vector<8x16xbf16>
    %cst_12 = arith.constant dense<0.000000e+00> : vector<8x128xf32>
    %22 = tpu.matmul %21, %19, %cst_12 {dimension_numbers = #tpu.dot_dimension_numbers<[1], [0], [0], [1], [0, 0, 1, 1], [], []>} : vector<8x16xbf16>, vector<16x128xbf16>, vector<8x128xf32> -> vector<8x128xf32>
    %23 = arith.addf %20, %22 : vector<8x128xf32>
    %c0_13 = arith.constant 0 : index
    %c0_14 = arith.constant 0 : index
    %24 = vector.load %arg5[%c0_13, %c0_14] : memref<8x128xf32, #tpu.memory_space<vmem>>, vector<8x128xf32>
    tpu.vector_store %arg5[%c0_13, %c0_14], %23 {strides = array<i32>} : memref<8x128xf32, #tpu.memory_space<vmem>>, vector<8x128xf32>,
    return
  }
  func.func @transform_0(%arg0: i32, %arg1: i32) -> (i32, i32) {
    %c0_i32 = arith.constant 0 : i32
    %c0_i32_0 = arith.constant 0 : i32
    return %arg1, %c0_i32 : i32, i32
  }
  func.func @transform_1(%arg0: i32, %arg1: i32) -> (i32, i32) {
    %c0_i32 = arith.constant 0 : i32
    %c0_i32_0 = arith.constant 0 : i32
    return %c0_i32, %arg0 : i32, i32
  }
  func.func @transform_2(%arg0: i32, %arg1: i32) -> (i32, i32) {
    %c0_i32 = arith.constant 0 : i32
    %c0_i32_0 = arith.constant 0 : i32
    %c0_i32_1 = arith.constant 0 : i32
    return %c0_i32, %c0_i32_0 : i32, i32
  }
  func.func @transform_3(%arg0: i32, %arg1: i32) -> (i32, i32) {
    %c0_i32 = arith.constant 0 : i32
    %c0_i32_0 = arith.constant 0 : i32
    return %c0_i32, %arg0 : i32, i32
  }
}

</mosaic_0001>

<llo_original>
// kernel: unicl_forward.3
$region0: #{unicl_forward.3}
  #allocation0 [shape = 'u32[]', space=smem, size = 0x4, offset = 0x4, fixed_abs, tag = 'smem constant byte address 0x4 - core index']
  #allocation1 [shape = 'u32[144,128]{1,0:T(1,128)}', space=vmem, size = 0x12000, scoped, tag = 'internal scratch']
  %s0 = inlined_call_operand.vmem [shape: bf16[16,128], index: 0, kind: input, shape index: {}]
  %s1 = inlined_call_operand.vmem [shape: bf16[128,128], index: 1, kind: input, shape index: {}]
  %s2 = inlined_call_operand.vmem [shape: bf16[2,8,8], index: 2, kind: input, shape index: {}]
  %s3 = inlined_call_operand.vmem [shape: f32[8,128], index: 3, kind: output, shape index: {}]
  %s4 = sld [smem:[#allocation0]]
  $region49: #{unicl_forward.3} parent=0
    _
  %s6 = ssub.s32 1, %s4
  %s7 = scalar_select 0, %s6, %s4
  loop: start=0, step=1, limit=4
  $region2: #{unicl_forward.3} parent=0 // loop_pre_header
    _
  $region3: #{unicl_forward.3} parent=0 // loop_header
    %s9 = sphi 0, %s13
    %p10 = scmp.ge.s32.totalorder %s9, 4
    %s16 = sphi 0, %s28
    %s17 = sphi 0, %s24
    %s18 = sphi 0, %s16
    %s19 = sphi 0, %s17
    %s20 = sphi 0, %s18
    %s21 = sphi 0, %s19
    %s31 = sphi 0, %s33
    %s34 = sphi 0, %s31
    %s35 = sphi 0, %s34
    %s51 = sphi 0, %s35
    %s57 = sphi 0, %s59
    %s60 = sphi 0, %s57
    %s61 = sphi 0, %s60
    %s77 = sphi 0, %s61
    %s83 = sphi 0, %s85
    %s86 = sphi 0, %s83
    %s87 = sphi 0, %s86
    %s103 = sphi 0, %s87
    %s109 = sphi 0, %s111
    %s112 = sphi 0, %s109
    %s113 = sphi 0, %s112
    %s129 = sphi 0, %s113
  $region4: #{unicl_forward.3} parent=0 // loop_header_branch
    %12 = sbr.rel (%p10) target = $region8
  $region5: #{unicl_forward.3} parent=0 // loop_body
    %s14 = ssub.s32 %s9, 1
    %s15 = ssub.s32 %s9, 2
    %s22 = sadd.s32 1, %s17
    %p23 = scmp.ge.s32.totalorder %s22, 2
    %s24 = scalar_select %p23, 0, %s22
    %s25 = sadd.s32 1, %s16
    %s26 = scalar_select %p23, %s25, %s16
    %p27 = scmp.ge.s32.totalorder %s26, 1
    %s28 = scalar_select %p27, 0, %s26
    %s29 = ssub.s32 %s17, %s24
    %p30 = scmp.eq.s32.totalorder %s29, 0
    %s32 = sadd.s32 %s31, 1
    %s33 = scalar_select %p30, %s31, %s32
    %p36 = pneg %p30
    %p37 = scmp.eq.s32.totalorder %s9, 1
    %p38 = por %p36, %p37
    %p39 = scmp.ne.s32.totalorder %s31, %s34
    %p40 = scmp.eq.s32.totalorder %s9, 0
    %p41 = por %p39, %p40
    %p42 = scmp.ne.s32.totalorder %s31, %s34
    %p43 = scmp.eq.s32.totalorder %s14, 1
    %p44 = por %p42, %p43
    %p45 = scmp.ne.s32.totalorder %s34, %s35
    %p46 = scmp.eq.s32.totalorder %s14, 0
    %p47 = por %p45, %p46
    %p48 = scmp.ne.s32.totalorder %s34, %s35
    %p49 = scmp.eq.s32.totalorder %s15, 1
    %p50 = por %p48, %p49
    %p52 = scmp.ne.s32.totalorder %s35, %s51
    %p53 = scmp.eq.s32.totalorder %s15, 0
    %p54 = por %p52, %p53
    %s55 = ssub.s32 %s16, %s28
    %p56 = scmp.eq.s32.totalorder %s55, 0
    %s58 = sadd.s32 %s57, 1
    %s59 = scalar_select %p56, %s57, %s58
    %p62 = pneg %p56
    %p63 = scmp.eq.s32.totalorder %s9, 1
    %p64 = por %p62, %p63
    %p65 = scmp.ne.s32.totalorder %s57, %s60
    %p66 = scmp.eq.s32.totalorder %s9, 0
    %p67 = por %p65, %p66
    %p68 = scmp.ne.s32.totalorder %s57, %s60
    %p69 = scmp.eq.s32.totalorder %s14, 1
    %p70 = por %p68, %p69
    %p71 = scmp.ne.s32.totalorder %s60, %s61
    %p72 = scmp.eq.s32.totalorder %s14, 0
    %p73 = por %p71, %p72
    %p74 = scmp.ne.s32.totalorder %s60, %s61
    %p75 = scmp.eq.s32.totalorder %s15, 1
    %p76 = por %p74, %p75
    %p78 = scmp.ne.s32.totalorder %s61, %s77
    %p79 = scmp.eq.s32.totalorder %s15, 0
    %p80 = por %p78, %p79
    %s81 = ssub.s32 %s17, %s24
    %p82 = scmp.eq.s32.totalorder %s81, 0
    %s84 = sadd.s32 %s83, 1
    %s85 = scalar_select %p82, %s83, %s84
    %p88 = pneg %p82
    %p89 = scmp.eq.s32.totalorder %s9, 1
    %p90 = por %p88, %p89
    %p91 = scmp.ne.s32.totalorder %s83, %s86
    %p92 = scmp.eq.s32.totalorder %s9, 0
    %p93 = por %p91, %p92
    %p94 = scmp.ne.s32.totalorder %s83, %s86
    %p95 = scmp.eq.s32.totalorder %s14, 1
    %p96 = por %p94, %p95
    %p97 = scmp.ne.s32.totalorder %s86, %s87
    %p98 = scmp.eq.s32.totalorder %s14, 0
    %p99 = por %p97, %p98
    %p100 = scmp.ne.s32.totalorder %s86, %s87
    %p101 = scmp.eq.s32.totalorder %s15, 1
    %p102 = por %p100, %p101
    %p104 = scmp.ne.s32.totalorder %s87, %s103
    %p105 = scmp.eq.s32.totalorder %s15, 0
    %p106 = por %p104, %p105
    %s107 = ssub.s32 %s16, %s28
    %p108 = scmp.eq.s32.totalorder %s107, 0
    %s110 = sadd.s32 %s109, 1
    %s111 = scalar_select %p108, %s109, %s110
    %p114 = pneg %p108
    %p115 = scmp.eq.s32.totalorder %s9, 1
    %p116 = por %p114, %p115
    %p117 = scmp.ne.s32.totalorder %s109, %s112
    %p118 = scmp.eq.s32.totalorder %s9, 0
    %p119 = por %p117, %p118
    %p120 = scmp.ne.s32.totalorder %s109, %s112
    %p121 = scmp.eq.s32.totalorder %s14, 1
    %p122 = por %p120, %p121
    %p123 = scmp.ne.s32.totalorder %s112, %s113
    %p124 = scmp.eq.s32.totalorder %s14, 0
    %p125 = por %p123, %p124
    %p126 = scmp.ne.s32.totalorder %s112, %s113
    %p127 = scmp.eq.s32.totalorder %s15, 1
    %p128 = por %p126, %p127
    %p130 = scmp.ne.s32.totalorder %s113, %s129
    %p131 = scmp.eq.s32.totalorder %s15, 0
    %p132 = por %p130, %p131
    %p133 = scmp.le.s32.totalorder 1, %s9
    %p134 = scmp.lt.s32.totalorder %s9, 3
    %p135 = pnand %p133, %p134
    %p136 = pneg %p135
    // Predicated region
    $region9: #{unicl_forward.3} parent=5 // pred_check
      _
    $region10: #{unicl_forward.3} parent=5 // pred_check_branch
      %138 = sbr.rel (%p135) target = $region12
    $region11: #{unicl_forward.3} parent=5 // pred_region
      %s139 = ssub.s32 %s9, 1
      // Predicated region
      $region13: #{unicl_forward.3} parent=11 // pred_check
        %p140 = pneg %p73
      $region14: #{unicl_forward.3} parent=11 // pred_check_branch
        %142 = sbr.rel (%p140) target = $region16
      $region15: #{unicl_forward.3} parent=11 // pred_region
        %p143 = scmp.lt.s32.totalorder %s18, 0
        %s144 = scalar_select %p143, %s18, 0
        %s145 = smul.addr %s144, 4
        %s146 = scalar_lea.vmem %s1, %s145
      $region16: #{unicl_forward.3} parent=11 // pred_fallthru
        _
    $region12: #{unicl_forward.3} parent=5 // pred_fallthru
      _
    %p147 = scmp.lt.s32.totalorder %s9, 2
    // Predicated region
    $region17: #{unicl_forward.3} parent=5 // pred_check
      %p148 = pneg %p147
    $region18: #{unicl_forward.3} parent=5 // pred_check_branch
      %150 = sbr.rel (%p148) target = $region20
    $region19: #{unicl_forward.3} parent=5 // pred_region
      // Predicated region
      $region21: #{unicl_forward.3} parent=19 // pred_check
        %p151 = pneg %p41
      $region22: #{unicl_forward.3} parent=19 // pred_check_branch
        %153 = sbr.rel (%p151) target = $region24
      $region23: #{unicl_forward.3} parent=19 // pred_region
        %p154 = scmp.lt.s32.totalorder %s17, 1
        %s155 = scalar_select %p154, %s17, 1
        %s156 = smul.addr %s155, 4
        %s157 = scalar_lea.vmem %s0, %s156
      $region24: #{unicl_forward.3} parent=19 // pred_fallthru
        _
      // Predicated region
      $region25: #{unicl_forward.3} parent=19 // pred_check
        %p158 = pneg %p93
      $region26: #{unicl_forward.3} parent=19 // pred_check_branch
        %160 = sbr.rel (%p158) target = $region28
      $region27: #{unicl_forward.3} parent=19 // pred_region
        %p161 = scmp.lt.s32.totalorder %s17, 1
        %s162 = scalar_select %p161, %s17, 1
        %s163 = smul.addr %s162, 4
        %s164 = scalar_lea.vmem %s2, %s163
      $region28: #{unicl_forward.3} parent=19 // pred_fallthru
        _
    $region20: #{unicl_forward.3} parent=5 // pred_fallthru
      _
    %p165 = scmp.le.s32.totalorder 1, %s9
    %p166 = scmp.lt.s32.totalorder %s9, 3
    %p167 = pnand %p165, %p166
    %p168 = pneg %p167
    // Predicated region
    $region29: #{unicl_forward.3} parent=5 // pred_check
      _
    $region30: #{unicl_forward.3} parent=5 // pred_check_branch
      %170 = sbr.rel (%p167) target = $region32
    $region31: #{unicl_forward.3} parent=5 // pred_region
      %s171 = ssub.s32 %s9, 1
      %p172 = scmp.lt.s32.totalorder %s19, 1
      %s173 = scalar_select %p172, %s19, 1
      %s174 = smul.addr %s173, 4
      %s175 = scalar_lea.vmem %s0, %s174
      %p176 = pneg %p47
      %p177 = pneg %p44
      %p178 = scmp.lt.s32.totalorder %s18, 0
      %s179 = scalar_select %p178, %s18, 0
      %s180 = smul.addr %s179, 4
      %s181 = scalar_lea.vmem %s1, %s180
      %p182 = pneg %p73
      %p183 = pneg %p70
      %p184 = scmp.lt.s32.totalorder %s19, 1
      %s185 = scalar_select %p184, %s19, 1
      %s186 = smul.addr %s185, 4
      %s187 = scalar_lea.vmem %s2, %s186
      %p188 = pneg %p99
      %p189 = pneg %p96
      %p190 = pneg %p125
      %p191 = pneg %p122
      %p192 = scmp.lt.s32.totalorder %s18, 0
      %s193 = scalar_select %p192, %s18, 0
      %s194 = smul.addr %s193, 8
      %s195 = scalar_lea.vmem %s3, %s194
      %p196 = scmp.lt.s32.totalorder %s19, 1
      %s197 = scalar_select %p196, %s19, 1
      %s198 = smul.addr %s197, 4
      %s199 = scalar_lea.vmem %s0, %s198
      %p200 = scmp.lt.s32.totalorder %s18, 0
      %s201 = scalar_select %p200, %s18, 0
      %s202 = smul.addr %s201, 4
      %s203 = scalar_lea.vmem %s1, %s202
      %p204 = scmp.lt.s32.totalorder %s19, 1
      %s205 = scalar_select %p204, %s19, 1
      %s206 = smul.addr %s205, 4
      %s207 = scalar_lea.vmem %s2, %s206
      %p208 = scmp.lt.s32.totalorder %s18, 0
      %s209 = scalar_select %p208, %s18, 0
      %s210 = smul.addr %s209, 8
      %s211 = scalar_lea.vmem %s3, %s210
      %p213 = scmp.eq.s32.totalorder %s19, 0
      // Predicated region
      $region33: #{unicl_forward.3} parent=31 // pred_check
        %p214 = pneg %p213
      $region34: #{unicl_forward.3} parent=31 // pred_check_branch
        %216 = sbr.rel (%p214) target = $region36
      $region35: #{unicl_forward.3} parent=31 // pred_region
        %217 = vst [vmem:[%s211] sm:$0xff] 0.0
      $region36: #{unicl_forward.3} parent=31 // pred_fallthru
        _
      %v218 = vld [vmem:[%s199] sm:$0xf]
      %v219 = vld [vmem:[%s203] sm:$0xf]
      %v220 = vld [vmem:[%s203 + $0x4] sm:$0xf]
      %v221 = vld [vmem:[%s203 + $0x8] sm:$0xf]
      %v222 = vld [vmem:[%s203 + $0xc] sm:$0xf]
      %v223 = vld [vmem:[%s203 + $0x10] sm:$0xf]
      %v224 = vld [vmem:[%s203 + $0x14] sm:$0xf]
      %v225 = vld [vmem:[%s203 + $0x18] sm:$0xf]
      %v226 = vld [vmem:[%s203 + $0x1c] sm:$0xf]
      %v227 = vld [vmem:[%s203 + $0x20] sm:$0xf]
      %v228 = vld [vmem:[%s203 + $0x24] sm:$0xf]
      %v229 = vld [vmem:[%s203 + $0x28] sm:$0xf]
      %v230 = vld [vmem:[%s203 + $0x2c] sm:$0xf]
      %v231 = vld [vmem:[%s203 + $0x30] sm:$0xf]
      %v232 = vld [vmem:[%s203 + $0x34] sm:$0xf]
      %v233 = vld [vmem:[%s203 + $0x38] sm:$0xf]
      %v234 = vld [vmem:[%s203 + $0x3c] sm:$0xf]
      %v251 = vunpack.c.l.b16 %v219
      %v252 = vunpack.c.l.b16 %v220
      %v253 = vunpack.c.l.b16 %v221
      %v254 = vunpack.c.l.b16 %v222
      %v255 = vunpack.c.l.b16 %v223
      %v256 = vunpack.c.l.b16 %v224
      %v257 = vunpack.c.l.b16 %v225
      %v258 = vunpack.c.l.b16 %v226
      %v259 = vunpack.c.l.b16 %v227
      %v260 = vunpack.c.l.b16 %v228
      %v261 = vunpack.c.l.b16 %v229
      %v262 = vunpack.c.l.b16 %v230
      %v263 = vunpack.c.l.b16 %v231
      %v264 = vunpack.c.l.b16 %v232
      %v265 = vunpack.c.l.b16 %v233
      %v266 = vunpack.c.l.b16 %v234
      %v267 = vpack.c.b16 %v252, %v251
      %v268 = vpack.c.b16 %v254, %v253
      %v269 = vpack.c.b16 %v256, %v255
      %v270 = vpack.c.b16 %v258, %v257
      %v271 = vpack.c.b16 %v260, %v259
      %v272 = vpack.c.b16 %v262, %v261
      %v273 = vpack.c.b16 %v264, %v263
      %v274 = vpack.c.b16 %v266, %v265
      %283 = vmatprep.subr.bf16.mxu0 0
      %284 = vmatpush1.bf16.msra.mxu0 %v267
      %285 = vmatprep.subr.bf16.mxu0 0
      %286 = vmatpush1.bf16.msra.mxu0 %v268
      %287 = vmatprep.subr.bf16.mxu0 0
      %288 = vmatpush1.bf16.msra.mxu0 %v269
      %289 = vmatprep.subr.bf16.mxu0 0
      %290 = vmatpush1.bf16.msra.mxu0 %v270
      %291 = vmatprep.subr.bf16.mxu0 0
      %292 = vmatpush1.bf16.msra.mxu0 %v271
      %293 = vmatprep.subr.bf16.mxu0 0
      %294 = vmatpush1.bf16.msra.mxu0 %v272
      %295 = vmatprep.subr.bf16.mxu0 0
      %296 = vmatpush1.bf16.msra.mxu0 %v273
      %297 = vmatprep.subr.bf16.mxu0 0
      %298 = vmatpush1.bf16.msra.mxu0 %v274
      %299 = vmatprep.subr.bf16.mxu0 0
      %300 = vmatpush1.bf16.msra.mxu0 0
      %301 = vmatprep.subr.bf16.mxu0 0
      %302 = vmatpush1.bf16.msra.mxu0 0
      %303 = vmatprep.subr.bf16.mxu0 0
      %304 = vmatpush1.bf16.msra.mxu0 0
      %305 = vmatprep.subr.bf16.mxu0 0
      %306 = vmatpush1.bf16.msra.mxu0 0
      %307 = vmatprep.subr.bf16.mxu0 0
      %308 = vmatpush1.bf16.msra.mxu0 0
      %309 = vmatprep.subr.bf16.mxu0 0
      %310 = vmatpush1.bf16.msra.mxu0 0
      %311 = vmatprep.subr.bf16.mxu0 0
      %312 = vmatpush1.bf16.msra.mxu0 0
      %313 = vmatprep.subr.bf16.mxu0 0
      %314 = vmatpush1.bf16.msra.mxu0 0
      %315 = vmatprep.mubr.bf16.mxu0 0
      %316 = vmatmul.mubr.bf16.gmra.mrb[0].mxu0 %v218
      %v317 = vpop.f32.mrb[0].mxu0
      %v318 = vadd.f32 0.0, %v317
      %v319 = vpop.f32.mrb[0].mxu0
      %v320 = vpop.f32.mrb[0].mxu0
      %v321 = vpop.f32.mrb[0].mxu0
      %322 = vdwg.mxu0
      %v323 = vpack.c.bf16 %v318, %v318
      %v324 = vtanh.bf16.pop %v323
      %v325 = vld [vmem:[%s211] sm:$0xff]
      %v326 = vld [vmem:[%s207] sm:$0xf]
      %vm327 = vcmask 64512
      %v329 = vsel %vm327, %v326, 0
      %vm331 = vcmask 1043456
      %v333 = vsel %vm331, %v324, 0
      %335 = vmatprep.subr.bf16.mxu0 0
      %336 = vmatpush1.bf16.msra.mxu0 %v333
      %337 = vmatprep.subr.bf16.mxu0 0
      %338 = vmatpush1.bf16.msra.mxu0 0
      %339 = vmatprep.subr.bf16.mxu0 0
      %340 = vmatpush1.bf16.msra.mxu0 0
      %341 = vmatprep.subr.bf16.mxu0 0
      %342 = vmatpush1.bf16.msra.mxu0 0
      %343 = vmatprep.subr.bf16.mxu0 0
      %344 = vmatpush1.bf16.msra.mxu0 0
      %345 = vmatprep.subr.bf16.mxu0 0
      %346 = vmatpush1.bf16.msra.mxu0 0
      %347 = vmatprep.subr.bf16.mxu0 0
      %348 = vmatpush1.bf16.msra.mxu0 0
      %349 = vmatprep.subr.bf16.mxu0 0
      %350 = vmatpush1.bf16.msra.mxu0 0
      %351 = vmatprep.subr.bf16.mxu0 0
      %352 = vmatpush1.bf16.msra.mxu0 0
      %353 = vmatprep.subr.bf16.mxu0 0
      %354 = vmatpush1.bf16.msra.mxu0 0
      %355 = vmatprep.subr.bf16.mxu0 0
      %356 = vmatpush1.bf16.msra.mxu0 0
      %357 = vmatprep.subr.bf16.mxu0 0
      %358 = vmatpush1.bf16.msra.mxu0 0
      %359 = vmatprep.subr.bf16.mxu0 0
      %360 = vmatpush1.bf16.msra.mxu0 0
      %361 = vmatprep.subr.bf16.mxu0 0
      %362 = vmatpush1.bf16.msra.mxu0 0
      %363 = vmatprep.subr.bf16.mxu0 0
      %364 = vmatpush1.bf16.msra.mxu0 0
      %365 = vmatprep.subr.bf16.mxu0 0
      %366 = vmatpush1.bf16.msra.mxu0 0
      %367 = vmatprep.mubr.bf16.mxu0 0
      %368 = vmatmul.mubr.bf16.gmra.mrb[0].mxu0 %v329
      %v369 = vpop.f32.mrb[0].mxu0
      %v370 = vadd.f32 0.0, %v369
      %v371 = vpop.f32.mrb[0].mxu0
      %v372 = vpop.f32.mrb[0].mxu0
      %v373 = vpop.f32.mrb[0].mxu0
      %374 = vdwg.mxu0
      %v375 = vadd.f32 %v325, %v370
      %376 = vst [vmem:[%s211] sm:$0xff] %v375
      %p377 = scmp.lt.s32.totalorder %s18, 0
      %s378 = scalar_select %p377, %s18, 0
      %s379 = smul.addr %s378, 8
      %s380 = scalar_lea.vmem %s3, %s379
      // Predicated region
      $region37: #{unicl_forward.3} parent=31 // pred_check
        %p381 = pneg %p122
      $region38: #{unicl_forward.3} parent=31 // pred_check_branch
        %383 = sbr.rel (%p381) target = $region40
      $region39: #{unicl_forward.3} parent=31 // pred_region
        _
      $region40: #{unicl_forward.3} parent=31 // pred_fallthru
        _
      // Predicated region
      $region41: #{unicl_forward.3} parent=31 // pred_check
        %p384 = pneg %p122
      $region42: #{unicl_forward.3} parent=31 // pred_check_branch
        %386 = sbr.rel (%p384) target = $region44
      $region43: #{unicl_forward.3} parent=31 // pred_region
        %p387 = scmp.lt.s32.totalorder %s18, 0
        %s388 = scalar_select %p387, %s18, 0
        %s389 = smul.addr %s388, 8
        %s390 = scalar_lea.vmem %s3, %s389
      $region44: #{unicl_forward.3} parent=31 // pred_fallthru
        _
    $region32: #{unicl_forward.3} parent=5 // pred_fallthru
      _
    %p391 = scmp.le.s32.totalorder 2, %s9
    // Predicated region
    $region45: #{unicl_forward.3} parent=5 // pred_check
      %p392 = pneg %p391
    $region46: #{unicl_forward.3} parent=5 // pred_check_branch
      %394 = sbr.rel (%p392) target = $region48
    $region47: #{unicl_forward.3} parent=5 // pred_region
      %s395 = ssub.s32 %s9, 2
    $region48: #{unicl_forward.3} parent=5 // pred_fallthru
      _
  $region6: #{unicl_forward.3} parent=0 // loop_footer
    %s13 = sadd.s32 1, %s9
  $region7: #{unicl_forward.3} parent=0 // loop_footer_branch
    %8 = sbr.rel target = $region3
  $region8: #{unicl_forward.3} parent=0 // loop_exit
    _

// kernel: unicl_forward.2
$region0: #{unicl_forward.2}
  #allocation0 [shape = 'u32[]', space=smem, size = 0x4, offset = 0x4, fixed_abs, tag = 'smem constant byte address 0x4 - core index']
  #allocation1 [shape = 'u32[144,128]{1,0:T(1,128)}', space=vmem, size = 0x12000, scoped, tag = 'internal scratch']
  %s0 = inlined_call_operand.vmem [shape: bf16[32,128], index: 0, kind: input, shape index: {}]
  %s1 = inlined_call_operand.vmem [shape: bf16[128,128], index: 1, kind: input, shape index: {}]
  %s2 = inlined_call_operand.vmem [shape: bf16[8,16], index: 2, kind: input, shape index: {}]
  %s3 = inlined_call_operand.vmem [shape: f32[8,128], index: 3, kind: output, shape index: {}]
  %s4 = sld [smem:[#allocation0]]
  $region49: #{unicl_forward.2} parent=0
    _
  %s6 = ssub.s32 1, %s4
  %s7 = scalar_select 0, %s6, %s4
  loop: start=0, step=1, limit=4
  $region2: #{unicl_forward.2} parent=0 // loop_pre_header
    _
  $region3: #{unicl_forward.2} parent=0 // loop_header
    %s9 = sphi 0, %s13
    %p10 = scmp.ge.s32.totalorder %s9, 4
    %s16 = sphi 0, %s28
    %s17 = sphi 0, %s24
    %s18 = sphi 0, %s16
    %s19 = sphi 0, %s17
    %s20 = sphi 0, %s18
    %s21 = sphi 0, %s19
    %s31 = sphi 0, %s33
    %s34 = sphi 0, %s31
    %s35 = sphi 0, %s34
    %s51 = sphi 0, %s35
    %s57 = sphi 0, %s59
    %s60 = sphi 0, %s57
    %s61 = sphi 0, %s60
    %s77 = sphi 0, %s61
    %s81 = sphi 0, %s81
    %s83 = sphi 0, %s81
    %s84 = sphi 0, %s83
    %s98 = sphi 0, %s84
    %s104 = sphi 0, %s106
    %s107 = sphi 0, %s104
    %s108 = sphi 0, %s107
    %s124 = sphi 0, %s108
  $region4: #{unicl_forward.2} parent=0 // loop_header_branch
    %12 = sbr.rel (%p10) target = $region8
  $region5: #{unicl_forward.2} parent=0 // loop_body
    %s14 = ssub.s32 %s9, 1
    %s15 = ssub.s32 %s9, 2
    %s22 = sadd.s32 1, %s17
    %p23 = scmp.ge.s32.totalorder %s22, 2
    %s24 = scalar_select %p23, 0, %s22
    %s25 = sadd.s32 1, %s16
    %s26 = scalar_select %p23, %s25, %s16
    %p27 = scmp.ge.s32.totalorder %s26, 1
    %s28 = scalar_select %p27, 0, %s26
    %s29 = ssub.s32 %s17, %s24
    %p30 = scmp.eq.s32.totalorder %s29, 0
    %s32 = sadd.s32 %s31, 1
    %s33 = scalar_select %p30, %s31, %s32
    %p36 = pneg %p30
    %p37 = scmp.eq.s32.totalorder %s9, 1
    %p38 = por %p36, %p37
    %p39 = scmp.ne.s32.totalorder %s31, %s34
    %p40 = scmp.eq.s32.totalorder %s9, 0
    %p41 = por %p39, %p40
    %p42 = scmp.ne.s32.totalorder %s31, %s34
    %p43 = scmp.eq.s32.totalorder %s14, 1
    %p44 = por %p42, %p43
    %p45 = scmp.ne.s32.totalorder %s34, %s35
    %p46 = scmp.eq.s32.totalorder %s14, 0
    %p47 = por %p45, %p46
    %p48 = scmp.ne.s32.totalorder %s34, %s35
    %p49 = scmp.eq.s32.totalorder %s15, 1
    %p50 = por %p48, %p49
    %p52 = scmp.ne.s32.totalorder %s35, %s51
    %p53 = scmp.eq.s32.totalorder %s15, 0
    %p54 = por %p52, %p53
    %s55 = ssub.s32 %s16, %s28
    %p56 = scmp.eq.s32.totalorder %s55, 0
    %s58 = sadd.s32 %s57, 1
    %s59 = scalar_select %p56, %s57, %s58
    %p62 = pneg %p56
    %p63 = scmp.eq.s32.totalorder %s9, 1
    %p64 = por %p62, %p63
    %p65 = scmp.ne.s32.totalorder %s57, %s60
    %p66 = scmp.eq.s32.totalorder %s9, 0
    %p67 = por %p65, %p66
    %p68 = scmp.ne.s32.totalorder %s57, %s60
    %p69 = scmp.eq.s32.totalorder %s14, 1
    %p70 = por %p68, %p69
    %p71 = scmp.ne.s32.totalorder %s60, %s61
    %p72 = scmp.eq.s32.totalorder %s14, 0
    %p73 = por %p71, %p72
    %p74 = scmp.ne.s32.totalorder %s60, %s61
    %p75 = scmp.eq.s32.totalorder %s15, 1
    %p76 = por %p74, %p75
    %p78 = scmp.ne.s32.totalorder %s61, %s77
    %p79 = scmp.eq.s32.totalorder %s15, 0
    %p80 = por %p78, %p79
    %s82 = sadd.s32 %s81, 1
    %p85 = scmp.eq.s32.totalorder %s9, 1
    %p86 = scmp.ne.s32.totalorder %s81, %s83
    %p87 = scmp.eq.s32.totalorder %s9, 0
    %p88 = por %p86, %p87
    %p89 = scmp.ne.s32.totalorder %s81, %s83
    %p90 = scmp.eq.s32.totalorder %s14, 1
    %p91 = por %p89, %p90
    %p92 = scmp.ne.s32.totalorder %s83, %s84
    %p93 = scmp.eq.s32.totalorder %s14, 0
    %p94 = por %p92, %p93
    %p95 = scmp.ne.s32.totalorder %s83, %s84
    %p96 = scmp.eq.s32.totalorder %s15, 1
    %p97 = por %p95, %p96
    %p99 = scmp.ne.s32.totalorder %s84, %s98
    %p100 = scmp.eq.s32.totalorder %s15, 0
    %p101 = por %p99, %p100
    %s102 = ssub.s32 %s16, %s28
    %p103 = scmp.eq.s32.totalorder %s102, 0
    %s105 = sadd.s32 %s104, 1
    %s106 = scalar_select %p103, %s104, %s105
    %p109 = pneg %p103
    %p110 = scmp.eq.s32.totalorder %s9, 1
    %p111 = por %p109, %p110
    %p112 = scmp.ne.s32.totalorder %s104, %s107
    %p113 = scmp.eq.s32.totalorder %s9, 0
    %p114 = por %p112, %p113
    %p115 = scmp.ne.s32.totalorder %s104, %s107
    %p116 = scmp.eq.s32.totalorder %s14, 1
    %p117 = por %p115, %p116
    %p118 = scmp.ne.s32.totalorder %s107, %s108
    %p119 = scmp.eq.s32.totalorder %s14, 0
    %p120 = por %p118, %p119
    %p121 = scmp.ne.s32.totalorder %s107, %s108
    %p122 = scmp.eq.s32.totalorder %s15, 1
    %p123 = por %p121, %p122
    %p125 = scmp.ne.s32.totalorder %s108, %s124
    %p126 = scmp.eq.s32.totalorder %s15, 0
    %p127 = por %p125, %p126
    %p128 = scmp.le.s32.totalorder 1, %s9
    %p129 = scmp.lt.s32.totalorder %s9, 3
    %p130 = pnand %p128, %p129
    %p131 = pneg %p130
    // Predicated region
    $region9: #{unicl_forward.2} parent=5 // pred_check
      _
    $region10: #{unicl_forward.2} parent=5 // pred_check_branch
      %133 = sbr.rel (%p130) target = $region12
    $region11: #{unicl_forward.2} parent=5 // pred_region
      %s134 = ssub.s32 %s9, 1
      // Predicated region
      $region13: #{unicl_forward.2} parent=11 // pred_check
        %p135 = pneg %p73
      $region14: #{unicl_forward.2} parent=11 // pred_check_branch
        %137 = sbr.rel (%p135) target = $region16
      $region15: #{unicl_forward.2} parent=11 // pred_region
        %p138 = scmp.lt.s32.totalorder %s18, 0
        %s139 = scalar_select %p138, %s18, 0
        %s140 = smul.addr %s139, 4
        %s141 = scalar_lea.vmem %s1, %s140
      $region16: #{unicl_forward.2} parent=11 // pred_fallthru
        _
      // Predicated region
      $region17: #{unicl_forward.2} parent=11 // pred_check
        %p142 = pneg %p94
      $region18: #{unicl_forward.2} parent=11 // pred_check_branch
        %144 = sbr.rel (%p142) target = $region20
      $region19: #{unicl_forward.2} parent=11 // pred_region
        _
      $region20: #{unicl_forward.2} parent=11 // pred_fallthru
        _
    $region12: #{unicl_forward.2} parent=5 // pred_fallthru
      _
    %p145 = scmp.lt.s32.totalorder %s9, 2
    // Predicated region
    $region21: #{unicl_forward.2} parent=5 // pred_check
      %p146 = pneg %p145
    $region22: #{unicl_forward.2} parent=5 // pred_check_branch
      %148 = sbr.rel (%p146) target = $region24
    $region23: #{unicl_forward.2} parent=5 // pred_region
      // Predicated region
      $region25: #{unicl_forward.2} parent=23 // pred_check
        %p149 = pneg %p41
      $region26: #{unicl_forward.2} parent=23 // pred_check_branch
        %151 = sbr.rel (%p149) target = $region28
      $region27: #{unicl_forward.2} parent=23 // pred_region
        %s152 = smul.u32 2, %s17
        %p153 = scmp.lt.s32.totalorder %s152, 3
        %s154 = scalar_select %p153, %s152, 3
        %s155 = smul.addr %s154, 4
        %s156 = scalar_lea.vmem %s0, %s155
        %s157 = smul.u32 2, %s17
      $region28: #{unicl_forward.2} parent=23 // pred_fallthru
        _
    $region24: #{unicl_forward.2} parent=5 // pred_fallthru
      _
    %p158 = scmp.le.s32.totalorder 1, %s9
    %p159 = scmp.lt.s32.totalorder %s9, 3
    %p160 = pnand %p158, %p159
    %p161 = pneg %p160
    // Predicated region
    $region29: #{unicl_forward.2} parent=5 // pred_check
      _
    $region30: #{unicl_forward.2} parent=5 // pred_check_branch
      %163 = sbr.rel (%p160) target = $region32
    $region31: #{unicl_forward.2} parent=5 // pred_region
      %s164 = ssub.s32 %s9, 1
      %s165 = smul.u32 2, %s19
      %p166 = scmp.lt.s32.totalorder %s165, 3
      %s167 = scalar_select %p166, %s165, 3
      %s168 = smul.addr %s167, 4
      %s169 = scalar_lea.vmem %s0, %s168
      %p170 = pneg %p47
      %p171 = pneg %p44
      %p172 = scmp.lt.s32.totalorder %s18, 0
      %s173 = scalar_select %p172, %s18, 0
      %s174 = smul.addr %s173, 4
      %s175 = scalar_lea.vmem %s1, %s174
      %p176 = pneg %p73
      %p177 = pneg %p70
      %p178 = pneg %p94
      %p179 = pneg %p91
      %p180 = pneg %p120
      %p181 = pneg %p117
      %p182 = scmp.lt.s32.totalorder %s18, 0
      %s183 = scalar_select %p182, %s18, 0
      %s184 = smul.addr %s183, 8
      %s185 = scalar_lea.vmem %s3, %s184
      %s186 = smul.u32 2, %s19
      %p187 = scmp.lt.s32.totalorder %s186, 3
      %s188 = scalar_select %p187, %s186, 3
      %s189 = smul.addr %s188, 4
      %s190 = scalar_lea.vmem %s0, %s189
      %s191 = smul.u32 2, %s19
      %p192 = scmp.lt.s32.totalorder %s18, 0
      %s193 = scalar_select %p192, %s18, 0
      %s194 = smul.addr %s193, 4
      %s195 = scalar_lea.vmem %s1, %s194
      %p196 = scmp.lt.s32.totalorder %s18, 0
      %s197 = scalar_select %p196, %s18, 0
      %s198 = smul.addr %s197, 8
      %s199 = scalar_lea.vmem %s3, %s198
      %p205 = scmp.eq.s32.totalorder %s19, 0
      // Predicated region
      $region33: #{unicl_forward.2} parent=31 // pred_check
        %p206 = pneg %p205
      $region34: #{unicl_forward.2} parent=31 // pred_check_branch
        %208 = sbr.rel (%p206) target = $region36
      $region35: #{unicl_forward.2} parent=31 // pred_region
        %209 = vst [vmem:[%s199] sm:$0xff] 0.0
      $region36: #{unicl_forward.2} parent=31 // pred_fallthru
        _
      %v210 = vld [vmem:[%s190] sm:$0xf]
      %v211 = vld [vmem:[%s190 + $0x4] sm:$0xf]
      %v212 = vld [vmem:[%s195] sm:$0xf]
      %v213 = vld [vmem:[%s195 + $0x4] sm:$0xf]
      %v214 = vld [vmem:[%s195 + $0x8] sm:$0xf]
      %v215 = vld [vmem:[%s195 + $0xc] sm:$0xf]
      %v216 = vld [vmem:[%s195 + $0x10] sm:$0xf]
      %v217 = vld [vmem:[%s195 + $0x14] sm:$0xf]
      %v218 = vld [vmem:[%s195 + $0x18] sm:$0xf]
      %v219 = vld [vmem:[%s195 + $0x1c] sm:$0xf]
      %v220 = vld [vmem:[%s195 + $0x20] sm:$0xf]
      %v221 = vld [vmem:[%s195 + $0x24] sm:$0xf]
      %v222 = vld [vmem:[%s195 + $0x28] sm:$0xf]
      %v223 = vld [vmem:[%s195 + $0x2c] sm:$0xf]
      %v224 = vld [vmem:[%s195 + $0x30] sm:$0xf]
      %v225 = vld [vmem:[%s195 + $0x34] sm:$0xf]
      %v226 = vld [vmem:[%s195 + $0x38] sm:$0xf]
      %v227 = vld [vmem:[%s195 + $0x3c] sm:$0xf]
      %v230 = vunpack.c.l.b16 %v210
      %v231 = vunpack.c.l.b16 %v211
      %v232 = vpack.c.b16 %v231, %v230
      %v250 = vunpack.c.l.b16 %v212
      %v251 = vunpack.c.l.b16 %v213
      %v252 = vunpack.c.l.b16 %v214
      %v253 = vunpack.c.l.b16 %v215
      %v254 = vunpack.c.l.b16 %v216
      %v255 = vunpack.c.l.b16 %v217
      %v256 = vunpack.c.l.b16 %v218
      %v257 = vunpack.c.l.b16 %v219
      %v258 = vunpack.c.l.b16 %v220
      %v259 = vunpack.c.l.b16 %v221
      %v260 = vunpack.c.l.b16 %v222
      %v261 = vunpack.c.l.b16 %v223
      %v262 = vunpack.c.l.b16 %v224
      %v263 = vunpack.c.l.b16 %v225
      %v264 = vunpack.c.l.b16 %v226
      %v265 = vunpack.c.l.b16 %v227
      %v266 = vpack.c.b16 %v251, %v250
      %v267 = vpack.c.b16 %v253, %v252
      %v268 = vpack.c.b16 %v255, %v254
      %v269 = vpack.c.b16 %v257, %v256
      %v270 = vpack.c.b16 %v259, %v258
      %v271 = vpack.c.b16 %v261, %v260
      %v272 = vpack.c.b16 %v263, %v262
      %v273 = vpack.c.b16 %v265, %v264
      %282 = vmatprep.subr.bf16.mxu0 0
      %283 = vmatpush1.bf16.msra.mxu0 %v266
      %284 = vmatprep.subr.bf16.mxu0 0
      %285 = vmatpush1.bf16.msra.mxu0 %v267
      %286 = vmatprep.subr.bf16.mxu0 0
      %287 = vmatpush1.bf16.msra.mxu0 %v268
      %288 = vmatprep.subr.bf16.mxu0 0
      %289 = vmatpush1.bf16.msra.mxu0 %v269
      %290 = vmatprep.subr.bf16.mxu0 0
      %291 = vmatpush1.bf16.msra.mxu0 %v270
      %292 = vmatprep.subr.bf16.mxu0 0
      %293 = vmatpush1.bf16.msra.mxu0 %v271
      %294 = vmatprep.subr.bf16.mxu0 0
      %295 = vmatpush1.bf16.msra.mxu0 %v272
      %296 = vmatprep.subr.bf16.mxu0 0
      %297 = vmatpush1.bf16.msra.mxu0 %v273
      %298 = vmatprep.subr.bf16.mxu0 0
      %299 = vmatpush1.bf16.msra.mxu0 0
      %300 = vmatprep.subr.bf16.mxu0 0
      %301 = vmatpush1.bf16.msra.mxu0 0
      %302 = vmatprep.subr.bf16.mxu0 0
      %303 = vmatpush1.bf16.msra.mxu0 0
      %304 = vmatprep.subr.bf16.mxu0 0
      %305 = vmatpush1.bf16.msra.mxu0 0
      %306 = vmatprep.subr.bf16.mxu0 0
      %307 = vmatpush1.bf16.msra.mxu0 0
      %308 = vmatprep.subr.bf16.mxu0 0
      %309 = vmatpush1.bf16.msra.mxu0 0
      %310 = vmatprep.subr.bf16.mxu0 0
      %311 = vmatpush1.bf16.msra.mxu0 0
      %312 = vmatprep.subr.bf16.mxu0 0
      %313 = vmatpush1.bf16.msra.mxu0 0
      %314 = vmatprep.mubr.bf16.mxu0 0
      %315 = vmatmul.mubr.bf16.gmra.mrb[0].mxu0 %v232
      %v316 = vpop.f32.mrb[0].mxu0
      %v317 = vadd.f32 0.0, %v316
      %v318 = vpop.f32.mrb[0].mxu0
      %v319 = vpop.f32.mrb[0].mxu0
      %v320 = vadd.f32 0.0, %v319
      %v321 = vpop.f32.mrb[0].mxu0
      %322 = vdwg.mxu0
      %v323 = vpack.c.bf16 %v320, %v317
      %v324 = vmul.bf16 %v323, 1056980736
      %v325 = vmul.bf16 %v323, 1027030327
      %v326 = vmul.bf16 %v325, %v323
      %v327 = vmul.bf16 %v326, %v323
      %v328 = vadd.bf16 %v323, %v327
      %v329 = vmul.bf16 %v328, 1061961548
      %v330 = vtanh.bf16.pop %v329
      %v331 = vadd.bf16 %v330, 1065369472
      %v332 = vmul.bf16 %v324, %v331
      %v333 = vld [vmem:[%s199] sm:$0xff]
      %v334 = vld [vmem:[%s2] sm:$0xf]
      %vm335 = vcmask 130048
      %v337 = vsel %vm335, %v334, 0
      %339 = vmatprep.subr.bf16.mxu0 0
      %340 = vmatpush1.bf16.msra.mxu0 %v332
      %341 = vmatprep.subr.bf16.mxu0 0
      %342 = vmatpush1.bf16.msra.mxu0 0
      %343 = vmatprep.subr.bf16.mxu0 0
      %344 = vmatpush1.bf16.msra.mxu0 0
      %345 = vmatprep.subr.bf16.mxu0 0
      %346 = vmatpush1.bf16.msra.mxu0 0
      %347 = vmatprep.subr.bf16.mxu0 0
      %348 = vmatpush1.bf16.msra.mxu0 0
      %349 = vmatprep.subr.bf16.mxu0 0
      %350 = vmatpush1.bf16.msra.mxu0 0
      %351 = vmatprep.subr.bf16.mxu0 0
      %352 = vmatpush1.bf16.msra.mxu0 0
      %353 = vmatprep.subr.bf16.mxu0 0
      %354 = vmatpush1.bf16.msra.mxu0 0
      %355 = vmatprep.subr.bf16.mxu0 0
      %356 = vmatpush1.bf16.msra.mxu0 0
      %357 = vmatprep.subr.bf16.mxu0 0
      %358 = vmatpush1.bf16.msra.mxu0 0
      %359 = vmatprep.subr.bf16.mxu0 0
      %360 = vmatpush1.bf16.msra.mxu0 0
      %361 = vmatprep.subr.bf16.mxu0 0
      %362 = vmatpush1.bf16.msra.mxu0 0
      %363 = vmatprep.subr.bf16.mxu0 0
      %364 = vmatpush1.bf16.msra.mxu0 0
      %365 = vmatprep.subr.bf16.mxu0 0
      %366 = vmatpush1.bf16.msra.mxu0 0
      %367 = vmatprep.subr.bf16.mxu0 0
      %368 = vmatpush1.bf16.msra.mxu0 0
      %369 = vmatprep.subr.bf16.mxu0 0
      %370 = vmatpush1.bf16.msra.mxu0 0
      %371 = vmatprep.mubr.bf16.mxu0 0
      %372 = vmatmul.mubr.bf16.gmra.mrb[0].mxu0 %v337
      %v373 = vpop.f32.mrb[0].mxu0
      %v374 = vadd.f32 0.0, %v373
      %v375 = vpop.f32.mrb[0].mxu0
      %v376 = vpop.f32.mrb[0].mxu0
      %v377 = vpop.f32.mrb[0].mxu0
      %378 = vdwg.mxu0
      %v379 = vadd.f32 %v333, %v374
      %380 = vst [vmem:[%s199] sm:$0xff] %v379
      %p381 = scmp.lt.s32.totalorder %s18, 0
      %s382 = scalar_select %p381, %s18, 0
      %s383 = smul.addr %s382, 8
      %s384 = scalar_lea.vmem %s3, %s383
      // Predicated region
      $region37: #{unicl_forward.2} parent=31 // pred_check
        %p385 = pneg %p117
      $region38: #{unicl_forward.2} parent=31 // pred_check_branch
        %387 = sbr.rel (%p385) target = $region40
      $region39: #{unicl_forward.2} parent=31 // pred_region
        _
      $region40: #{unicl_forward.2} parent=31 // pred_fallthru
        _
      // Predicated region
      $region41: #{unicl_forward.2} parent=31 // pred_check
        %p388 = pneg %p117
      $region42: #{unicl_forward.2} parent=31 // pred_check_branch
        %390 = sbr.rel (%p388) target = $region44
      $region43: #{unicl_forward.2} parent=31 // pred_region
        %p391 = scmp.lt.s32.totalorder %s18, 0
        %s392 = scalar_select %p391, %s18, 0
        %s393 = smul.addr %s392, 8
        %s394 = scalar_lea.vmem %s3, %s393
      $region44: #{unicl_forward.2} parent=31 // pred_fallthru
        _
    $region32: #{unicl_forward.2} parent=5 // pred_fallthru
      _
    %p395 = scmp.le.s32.totalorder 2, %s9
    // Predicated region
    $region45: #{unicl_forward.2} parent=5 // pred_check
      %p396 = pneg %p395
    $region46: #{unicl_forward.2} parent=5 // pred_check_branch
      %398 = sbr.rel (%p396) target = $region48
    $region47: #{unicl_forward.2} parent=5 // pred_region
      %s399 = ssub.s32 %s9, 2
    $region48: #{unicl_forward.2} parent=5 // pred_fallthru
      _
  $region6: #{unicl_forward.2} parent=0 // loop_footer
    %s13 = sadd.s32 1, %s9
  $region7: #{unicl_forward.2} parent=0 // loop_footer_branch
    %8 = sbr.rel target = $region3
  $region8: #{unicl_forward.2} parent=0 // loop_exit
    _

// kernel: unicl_forward.3
$region0: #{unicl_forward.3}
  #allocation0 [shape = 'u32[]', space=smem, size = 0x4, offset = 0x4, fixed_abs, tag = 'smem constant byte address 0x4 - core index']
  #allocation1 [shape = 'u32[144,128]{1,0:T(1,128)}', space=vmem, size = 0x12000, scoped, tag = 'internal scratch']
  %s0 = inlined_call_operand.vmem [shape: bf16[16,128], index: 0, kind: input, shape index: {}]
  %s1 = inlined_call_operand.vmem [shape: bf16[128,128], index: 1, kind: input, shape index: {}]
  %s2 = inlined_call_operand.vmem [shape: bf16[2,8,8], index: 2, kind: input, shape index: {}]
  %s3 = inlined_call_operand.vmem [shape: f32[8,128], index: 3, kind: output, shape index: {}]
  %s4 = sld [smem:[#allocation0]]
  $region49: #{unicl_forward.3} parent=0
    _
  %s6 = ssub.s32 1, %s4
  %s7 = scalar_select 0, %s6, %s4
  loop: start=0, step=1, limit=4
  $region2: #{unicl_forward.3} parent=0 // loop_pre_header
    _
  $region3: #{unicl_forward.3} parent=0 // loop_header
    %s9 = sphi 0, %s13
    %p10 = scmp.ge.s32.totalorder %s9, 4
    %s16 = sphi 0, %s28
    %s17 = sphi 0, %s24
    %s18 = sphi 0, %s16
    %s19 = sphi 0, %s17
    %s20 = sphi 0, %s18
    %s21 = sphi 0, %s19
    %s31 = sphi 0, %s33
    %s34 = sphi 0, %s31
    %s35 = sphi 0, %s34
    %s51 = sphi 0, %s35
    %s57 = sphi 0, %s59
    %s60 = sphi 0, %s57
    %s61 = sphi 0, %s60
    %s77 = sphi 0, %s61
    %s83 = sphi 0, %s85
    %s86 = sphi 0, %s83
    %s87 = sphi 0, %s86
    %s103 = sphi 0, %s87
    %s109 = sphi 0, %s111
    %s112 = sphi 0, %s109
    %s113 = sphi 0, %s112
    %s129 = sphi 0, %s113
  $region4: #{unicl_forward.3} parent=0 // loop_header_branch
    %12 = sbr.rel (%p10) target = $region8
  $region5: #{unicl_forward.3} parent=0 // loop_body
    %s14 = ssub.s32 %s9, 1
    %s15 = ssub.s32 %s9, 2
    %s22 = sadd.s32 1, %s17
    %p23 = scmp.ge.s32.totalorder %s22, 2
    %s24 = scalar_select %p23, 0, %s22
    %s25 = sadd.s32 1, %s16
    %s26 = scalar_select %p23, %s25, %s16
    %p27 = scmp.ge.s32.totalorder %s26, 1
    %s28 = scalar_select %p27, 0, %s26
    %s29 = ssub.s32 %s17, %s24
    %p30 = scmp.eq.s32.totalorder %s29, 0
    %s32 = sadd.s32 %s31, 1
    %s33 = scalar_select %p30, %s31, %s32
    %p36 = pneg %p30
    %p37 = scmp.eq.s32.totalorder %s9, 1
    %p38 = por %p36, %p37
    %p39 = scmp.ne.s32.totalorder %s31, %s34
    %p40 = scmp.eq.s32.totalorder %s9, 0
    %p41 = por %p39, %p40
    %p42 = scmp.ne.s32.totalorder %s31, %s34
    %p43 = scmp.eq.s32.totalorder %s14, 1
    %p44 = por %p42, %p43
    %p45 = scmp.ne.s32.totalorder %s34, %s35
    %p46 = scmp.eq.s32.totalorder %s14, 0
    %p47 = por %p45, %p46
    %p48 = scmp.ne.s32.totalorder %s34, %s35
    %p49 = scmp.eq.s32.totalorder %s15, 1
    %p50 = por %p48, %p49
    %p52 = scmp.ne.s32.totalorder %s35, %s51
    %p53 = scmp.eq.s32.totalorder %s15, 0
    %p54 = por %p52, %p53
    %s55 = ssub.s32 %s16, %s28
    %p56 = scmp.eq.s32.totalorder %s55, 0
    %s58 = sadd.s32 %s57, 1
    %s59 = scalar_select %p56, %s57, %s58
    %p62 = pneg %p56
    %p63 = scmp.eq.s32.totalorder %s9, 1
    %p64 = por %p62, %p63
    %p65 = scmp.ne.s32.totalorder %s57, %s60
    %p66 = scmp.eq.s32.totalorder %s9, 0
    %p67 = por %p65, %p66
    %p68 = scmp.ne.s32.totalorder %s57, %s60
    %p69 = scmp.eq.s32.totalorder %s14, 1
    %p70 = por %p68, %p69
    %p71 = scmp.ne.s32.totalorder %s60, %s61
    %p72 = scmp.eq.s32.totalorder %s14, 0
    %p73 = por %p71, %p72
    %p74 = scmp.ne.s32.totalorder %s60, %s61
    %p75 = scmp.eq.s32.totalorder %s15, 1
    %p76 = por %p74, %p75
    %p78 = scmp.ne.s32.totalorder %s61, %s77
    %p79 = scmp.eq.s32.totalorder %s15, 0
    %p80 = por %p78, %p79
    %s81 = ssub.s32 %s17, %s24
    %p82 = scmp.eq.s32.totalorder %s81, 0
    %s84 = sadd.s32 %s83, 1
    %s85 = scalar_select %p82, %s83, %s84
    %p88 = pneg %p82
    %p89 = scmp.eq.s32.totalorder %s9, 1
    %p90 = por %p88, %p89
    %p91 = scmp.ne.s32.totalorder %s83, %s86
    %p92 = scmp.eq.s32.totalorder %s9, 0
    %p93 = por %p91, %p92
    %p94 = scmp.ne.s32.totalorder %s83, %s86
    %p95 = scmp.eq.s32.totalorder %s14, 1
    %p96 = por %p94, %p95
    %p97 = scmp.ne.s32.totalorder %s86, %s87
    %p98 = scmp.eq.s32.totalorder %s14, 0
    %p99 = por %p97, %p98
    %p100 = scmp.ne.s32.totalorder %s86, %s87
    %p101 = scmp.eq.s32.totalorder %s15, 1
    %p102 = por %p100, %p101
    %p104 = scmp.ne.s32.totalorder %s87, %s103
    %p105 = scmp.eq.s32.totalorder %s15, 0
    %p106 = por %p104, %p105
    %s107 = ssub.s32 %s16, %s28
    %p108 = scmp.eq.s32.totalorder %s107, 0
    %s110 = sadd.s32 %s109, 1
    %s111 = scalar_select %p108, %s109, %s110
    %p114 = pneg %p108
    %p115 = scmp.eq.s32.totalorder %s9, 1
    %p116 = por %p114, %p115
    %p117 = scmp.ne.s32.totalorder %s109, %s112
    %p118 = scmp.eq.s32.totalorder %s9, 0
    %p119 = por %p117, %p118
    %p120 = scmp.ne.s32.totalorder %s109, %s112
    %p121 = scmp.eq.s32.totalorder %s14, 1
    %p122 = por %p120, %p121
    %p123 = scmp.ne.s32.totalorder %s112, %s113
    %p124 = scmp.eq.s32.totalorder %s14, 0
    %p125 = por %p123, %p124
    %p126 = scmp.ne.s32.totalorder %s112, %s113
    %p127 = scmp.eq.s32.totalorder %s15, 1
    %p128 = por %p126, %p127
    %p130 = scmp.ne.s32.totalorder %s113, %s129
    %p131 = scmp.eq.s32.totalorder %s15, 0
    %p132 = por %p130, %p131
    %p133 = scmp.le.s32.totalorder 1, %s9
    %p134 = scmp.lt.s32.totalorder %s9, 3
    %p135 = pnand %p133, %p134
    %p136 = pneg %p135
    // Predicated region
    $region9: #{unicl_forward.3} parent=5 // pred_check
      _
    $region10: #{unicl_forward.3} parent=5 // pred_check_branch
      %138 = sbr.rel (%p135) target = $region12
    $region11: #{unicl_forward.3} parent=5 // pred_region
      %s139 = ssub.s32 %s9, 1
      // Predicated region
      $region13: #{unicl_forward.3} parent=11 // pred_check
        %p140 = pneg %p73
      $region14: #{unicl_forward.3} parent=11 // pred_check_branch
        %142 = sbr.rel (%p140) target = $region16
      $region15: #{unicl_forward.3} parent=11 // pred_region
        %p143 = scmp.lt.s32.totalorder %s18, 0
        %s144 = scalar_select %p143, %s18, 0
        %s145 = smul.addr %s144, 4
        %s146 = scalar_lea.vmem %s1, %s145
      $region16: #{unicl_forward.3} parent=11 // pred_fallthru
        _
    $region12: #{unicl_forward.3} parent=5 // pred_fallthru
      _
    %p147 = scmp.lt.s32.totalorder %s9, 2
    // Predicated region
    $region17: #{unicl_forward.3} parent=5 // pred_check
      %p148 = pneg %p147
    $region18: #{unicl_forward.3} parent=5 // pred_check_branch
      %150 = sbr.rel (%p148) target = $region20
    $region19: #{unicl_forward.3} parent=5 // pred_region
      // Predicated region
      $region21: #{unicl_forward.3} parent=19 // pred_check
        %p151 = pneg %p41
      $region22: #{unicl_forward.3} parent=19 // pred_check_branch
        %153 = sbr.rel (%p151) target = $region24
      $region23: #{unicl_forward.3} parent=19 // pred_region
        %p154 = scmp.lt.s32.totalorder %s17, 1
        %s155 = scalar_select %p154, %s17, 1
        %s156 = smul.addr %s155, 4
        %s157 = scalar_lea.vmem %s0, %s156
      $region24: #{unicl_forward.3} parent=19 // pred_fallthru
        _
      // Predicated region
      $region25: #{unicl_forward.3} parent=19 // pred_check
        %p158 = pneg %p93
      $region26: #{unicl_forward.3} parent=19 // pred_check_branch
        %160 = sbr.rel (%p158) target = $region28
      $region27: #{unicl_forward.3} parent=19 // pred_region
        %p161 = scmp.lt.s32.totalorder %s17, 1
        %s162 = scalar_select %p161, %s17, 1
        %s163 = smul.addr %s162, 4
        %s164 = scalar_lea.vmem %s2, %s163
      $region28: #{unicl_forward.3} parent=19 // pred_fallthru
        _
    $region20: #{unicl_forward.3} parent=5 // pred_fallthru
      _
    %p165 = scmp.le.s32.totalorder 1, %s9
    %p166 = scmp.lt.s32.totalorder %s9, 3
    %p167 = pnand %p165, %p166
    %p168 = pneg %p167
    // Predicated region
    $region29: #{unicl_forward.3} parent=5 // pred_check
      _
    $region30: #{unicl_forward.3} parent=5 // pred_check_branch
      %170 = sbr.rel (%p167) target = $region32
    $region31: #{unicl_forward.3} parent=5 // pred_region
      %s171 = ssub.s32 %s9, 1
      %p172 = scmp.lt.s32.totalorder %s19, 1
      %s173 = scalar_select %p172, %s19, 1
      %s174 = smul.addr %s173, 4
      %s175 = scalar_lea.vmem %s0, %s174
      %p176 = pneg %p47
      %p177 = pneg %p44
      %p178 = scmp.lt.s32.totalorder %s18, 0
      %s179 = scalar_select %p178, %s18, 0
      %s180 = smul.addr %s179, 4
      %s181 = scalar_lea.vmem %s1, %s180
      %p182 = pneg %p73
      %p183 = pneg %p70
      %p184 = scmp.lt.s32.totalorder %s19, 1
      %s185 = scalar_select %p184, %s19, 1
      %s186 = smul.addr %s185, 4
      %s187 = scalar_lea.vmem %s2, %s186
      %p188 = pneg %p99
      %p189 = pneg %p96
      %p190 = pneg %p125
      %p191 = pneg %p122
      %p192 = scmp.lt.s32.totalorder %s18, 0
      %s193 = scalar_select %p192, %s18, 0
      %s194 = smul.addr %s193, 8
      %s195 = scalar_lea.vmem %s3, %s194
      %p196 = scmp.lt.s32.totalorder %s19, 1
      %s197 = scalar_select %p196, %s19, 1
      %s198 = smul.addr %s197, 4
      %s199 = scalar_lea.vmem %s0, %s198
      %p200 = scmp.lt.s32.totalorder %s18, 0
      %s201 = scalar_select %p200, %s18, 0
      %s202 = smul.addr %s201, 4
      %s203 = scalar_lea.vmem %s1, %s202
      %p204 = scmp.lt.s32.totalorder %s19, 1
      %s205 = scalar_select %p204, %s19, 1
      %s206 = smul.addr %s205, 4
      %s207 = scalar_lea.vmem %s2, %s206
      %p208 = scmp.lt.s32.totalorder %s18, 0
      %s209 = scalar_select %p208, %s18, 0
      %s210 = smul.addr %s209, 8
      %s211 = scalar_lea.vmem %s3, %s210
      %p213 = scmp.eq.s32.totalorder %s19, 0
      // Predicated region
      $region33: #{unicl_forward.3} parent=31 // pred_check
        %p214 = pneg %p213
      $region34: #{unicl_forward.3} parent=31 // pred_check_branch
        %216 = sbr.rel (%p214) target = $region36
      $region35: #{unicl_forward.3} parent=31 // pred_region
        %217 = vst [vmem:[%s211] sm:$0xff] 0.0
      $region36: #{unicl_forward.3} parent=31 // pred_fallthru
        _
      %v218 = vld [vmem:[%s199] sm:$0xf]
      %v219 = vld [vmem:[%s203] sm:$0xf]
      %v220 = vld [vmem:[%s203 + $0x4] sm:$0xf]
      %v221 = vld [vmem:[%s203 + $0x8] sm:$0xf]
      %v222 = vld [vmem:[%s203 + $0xc] sm:$0xf]
      %v223 = vld [vmem:[%s203 + $0x10] sm:$0xf]
      %v224 = vld [vmem:[%s203 + $0x14] sm:$0xf]
      %v225 = vld [vmem:[%s203 + $0x18] sm:$0xf]
      %v226 = vld [vmem:[%s203 + $0x1c] sm:$0xf]
      %v227 = vld [vmem:[%s203 + $0x20] sm:$0xf]
      %v228 = vld [vmem:[%s203 + $0x24] sm:$0xf]
      %v229 = vld [vmem:[%s203 + $0x28] sm:$0xf]
      %v230 = vld [vmem:[%s203 + $0x2c] sm:$0xf]
      %v231 = vld [vmem:[%s203 + $0x30] sm:$0xf]
      %v232 = vld [vmem:[%s203 + $0x34] sm:$0xf]
      %v233 = vld [vmem:[%s203 + $0x38] sm:$0xf]
      %v234 = vld [vmem:[%s203 + $0x3c] sm:$0xf]
      %v251 = vunpack.c.l.b16 %v219
      %v252 = vunpack.c.l.b16 %v220
      %v253 = vunpack.c.l.b16 %v221
      %v254 = vunpack.c.l.b16 %v222
      %v255 = vunpack.c.l.b16 %v223
      %v256 = vunpack.c.l.b16 %v224
      %v257 = vunpack.c.l.b16 %v225
      %v258 = vunpack.c.l.b16 %v226
      %v259 = vunpack.c.l.b16 %v227
      %v260 = vunpack.c.l.b16 %v228
      %v261 = vunpack.c.l.b16 %v229
      %v262 = vunpack.c.l.b16 %v230
      %v263 = vunpack.c.l.b16 %v231
      %v264 = vunpack.c.l.b16 %v232
      %v265 = vunpack.c.l.b16 %v233
      %v266 = vunpack.c.l.b16 %v234
      %v267 = vpack.c.b16 %v252, %v251
      %v268 = vpack.c.b16 %v254, %v253
      %v269 = vpack.c.b16 %v256, %v255
      %v270 = vpack.c.b16 %v258, %v257
      %v271 = vpack.c.b16 %v260, %v259
      %v272 = vpack.c.b16 %v262, %v261
      %v273 = vpack.c.b16 %v264, %v263
      %v274 = vpack.c.b16 %v266, %v265
      %283 = vmatprep.subr.bf16.mxu0 0
      %284 = vmatpush1.bf16.msra.mxu0 %v267
      %285 = vmatprep.subr.bf16.mxu0 0
      %286 = vmatpush1.bf16.msra.mxu0 %v268
      %287 = vmatprep.subr.bf16.mxu0 0
      %288 = vmatpush1.bf16.msra.mxu0 %v269
      %289 = vmatprep.subr.bf16.mxu0 0
      %290 = vmatpush1.bf16.msra.mxu0 %v270
      %291 = vmatprep.subr.bf16.mxu0 0
      %292 = vmatpush1.bf16.msra.mxu0 %v271
      %293 = vmatprep.subr.bf16.mxu0 0
      %294 = vmatpush1.bf16.msra.mxu0 %v272
      %295 = vmatprep.subr.bf16.mxu0 0
      %296 = vmatpush1.bf16.msra.mxu0 %v273
      %297 = vmatprep.subr.bf16.mxu0 0
      %298 = vmatpush1.bf16.msra.mxu0 %v274
      %299 = vmatprep.subr.bf16.mxu0 0
      %300 = vmatpush1.bf16.msra.mxu0 0
      %301 = vmatprep.subr.bf16.mxu0 0
      %302 = vmatpush1.bf16.msra.mxu0 0
      %303 = vmatprep.subr.bf16.mxu0 0
      %304 = vmatpush1.bf16.msra.mxu0 0
      %305 = vmatprep.subr.bf16.mxu0 0
      %306 = vmatpush1.bf16.msra.mxu0 0
      %307 = vmatprep.subr.bf16.mxu0 0
      %308 = vmatpush1.bf16.msra.mxu0 0
      %309 = vmatprep.subr.bf16.mxu0 0
      %310 = vmatpush1.bf16.msra.mxu0 0
      %311 = vmatprep.subr.bf16.mxu0 0
      %312 = vmatpush1.bf16.msra.mxu0 0
      %313 = vmatprep.subr.bf16.mxu0 0
      %314 = vmatpush1.bf16.msra.mxu0 0
      %315 = vmatprep.mubr.bf16.mxu0 0
      %316 = vmatmul.mubr.bf16.gmra.mrb[0].mxu0 %v218
      %v317 = vpop.f32.mrb[0].mxu0
      %v318 = vadd.f32 0.0, %v317
      %v319 = vpop.f32.mrb[0].mxu0
      %v320 = vpop.f32.mrb[0].mxu0
      %v321 = vpop.f32.mrb[0].mxu0
      %322 = vdwg.mxu0
      %v323 = vpack.c.bf16 %v318, %v318
      %v324 = vtanh.bf16.pop %v323
      %v325 = vld [vmem:[%s211] sm:$0xff]
      %v326 = vld [vmem:[%s207] sm:$0xf]
      %vm327 = vcmask 64512
      %v329 = vsel %vm327, %v326, 0
      %vm331 = vcmask 1043456
      %v333 = vsel %vm331, %v324, 0
      %335 = vmatprep.subr.bf16.mxu0 0
      %336 = vmatpush1.bf16.msra.mxu0 %v333
      %337 = vmatprep.subr.bf16.mxu0 0
      %338 = vmatpush1.bf16.msra.mxu0 0
      %339 = vmatprep.subr.bf16.mxu0 0
      %340 = vmatpush1.bf16.msra.mxu0 0
      %341 = vmatprep.subr.bf16.mxu0 0
      %342 = vmatpush1.bf16.msra.mxu0 0
      %343 = vmatprep.subr.bf16.mxu0 0
      %344 = vmatpush1.bf16.msra.mxu0 0
      %345 = vmatprep.subr.bf16.mxu0 0
      %346 = vmatpush1.bf16.msra.mxu0 0
      %347 = vmatprep.subr.bf16.mxu0 0
      %348 = vmatpush1.bf16.msra.mxu0 0
      %349 = vmatprep.subr.bf16.mxu0 0
      %350 = vmatpush1.bf16.msra.mxu0 0
      %351 = vmatprep.subr.bf16.mxu0 0
      %352 = vmatpush1.bf16.msra.mxu0 0
      %353 = vmatprep.subr.bf16.mxu0 0
      %354 = vmatpush1.bf16.msra.mxu0 0
      %355 = vmatprep.subr.bf16.mxu0 0
      %356 = vmatpush1.bf16.msra.mxu0 0
      %357 = vmatprep.subr.bf16.mxu0 0
      %358 = vmatpush1.bf16.msra.mxu0 0
      %359 = vmatprep.subr.bf16.mxu0 0
      %360 = vmatpush1.bf16.msra.mxu0 0
      %361 = vmatprep.subr.bf16.mxu0 0
      %362 = vmatpush1.bf16.msra.mxu0 0
      %363 = vmatprep.subr.bf16.mxu0 0
      %364 = vmatpush1.bf16.msra.mxu0 0
      %365 = vmatprep.subr.bf16.mxu0 0
      %366 = vmatpush1.bf16.msra.mxu0 0
      %367 = vmatprep.mubr.bf16.mxu0 0
      %368 = vmatmul.mubr.bf16.gmra.mrb[0].mxu0 %v329
      %v369 = vpop.f32.mrb[0].mxu0
      %v370 = vadd.f32 0.0, %v369
      %v371 = vpop.f32.mrb[0].mxu0
      %v372 = vpop.f32.mrb[0].mxu0
      %v373 = vpop.f32.mrb[0].mxu0
      %374 = vdwg.mxu0
      %v375 = vadd.f32 %v325, %v370
      %376 = vst [vmem:[%s211] sm:$0xff] %v375
      %p377 = scmp.lt.s32.totalorder %s18, 0
      %s378 = scalar_select %p377, %s18, 0
      %s379 = smul.addr %s378, 8
      %s380 = scalar_lea.vmem %s3, %s379
      // Predicated region
      $region37: #{unicl_forward.3} parent=31 // pred_check
        %p381 = pneg %p122
      $region38: #{unicl_forward.3} parent=31 // pred_check_branch
        %383 = sbr.rel (%p381) target = $region40
      $region39: #{unicl_forward.3} parent=31 // pred_region
        _
      $region40: #{unicl_forward.3} parent=31 // pred_fallthru
        _
      // Predicated region
      $region41: #{unicl_forward.3} parent=31 // pred_check
        %p384 = pneg %p122
      $region42: #{unicl_forward.3} parent=31 // pred_check_branch
        %386 = sbr.rel (%p384) target = $region44
      $region43: #{unicl_forward.3} parent=31 // pred_region
        %p387 = scmp.lt.s32.totalorder %s18, 0
        %s388 = scalar_select %p387, %s18, 0
        %s389 = smul.addr %s388, 8
        %s390 = scalar_lea.vmem %s3, %s389
      $region44: #{unicl_forward.3} parent=31 // pred_fallthru
        _
    $region32: #{unicl_forward.3} parent=5 // pred_fallthru
      _
    %p391 = scmp.le.s32.totalorder 2, %s9
    // Predicated region
    $region45: #{unicl_forward.3} parent=5 // pred_check
      %p392 = pneg %p391
    $region46: #{unicl_forward.3} parent=5 // pred_check_branch
      %394 = sbr.rel (%p392) target = $region48
    $region47: #{unicl_forward.3} parent=5 // pred_region
      %s395 = ssub.s32 %s9, 2
    $region48: #{unicl_forward.3} parent=5 // pred_fallthru
      _
  $region6: #{unicl_forward.3} parent=0 // loop_footer
    %s13 = sadd.s32 1, %s9
  $region7: #{unicl_forward.3} parent=0 // loop_footer_branch
    %8 = sbr.rel target = $region3
  $region8: #{unicl_forward.3} parent=0 // loop_exit
    _

// kernel: unicl_forward.2
$region0: #{unicl_forward.2}
  #allocation0 [shape = 'u32[]', space=smem, size = 0x4, offset = 0x4, fixed_abs, tag = 'smem constant byte address 0x4 - core index']
  #allocation1 [shape = 'u32[144,128]{1,0:T(1,128)}', space=vmem, size = 0x12000, scoped, tag = 'internal scratch']
  %s0 = inlined_call_operand.vmem [shape: bf16[32,128], index: 0, kind: input, shape index: {}]
  %s1 = inlined_call_operand.vmem [shape: bf16[128,128], index: 1, kind: input, shape index: {}]
  %s2 = inlined_call_operand.vmem [shape: bf16[8,16], index: 2, kind: input, shape index: {}]
  %s3 = inlined_call_operand.vmem [shape: f32[8,128], index: 3, kind: output, shape index: {}]
  %s4 = sld [smem:[#allocation0]]
  $region49: #{unicl_forward.2} parent=0
    _
  %s6 = ssub.s32 1, %s4
  %s7 = scalar_select 0, %s6, %s4
  loop: start=0, step=1, limit=4
  $region2: #{unicl_forward.2} parent=0 // loop_pre_header
    _
  $region3: #{unicl_forward.2} parent=0 // loop_header
    %s9 = sphi 0, %s13
    %p10 = scmp.ge.s32.totalorder %s9, 4
    %s16 = sphi 0, %s28
    %s17 = sphi 0, %s24
    %s18 = sphi 0, %s16
    %s19 = sphi 0, %s17
    %s20 = sphi 0, %s18
    %s21 = sphi 0, %s19
    %s31 = sphi 0, %s33
    %s34 = sphi 0, %s31
    %s35 = sphi 0, %s34
    %s51 = sphi 0, %s35
    %s57 = sphi 0, %s59
    %s60 = sphi 0, %s57
    %s61 = sphi 0, %s60
    %s77 = sphi 0, %s61
    %s81 = sphi 0, %s81
    %s83 = sphi 0, %s81
    %s84 = sphi 0, %s83
    %s98 = sphi 0, %s84
    %s104 = sphi 0, %s106
    %s107 = sphi 0, %s104
    %s108 = sphi 0, %s107
    %s124 = sphi 0, %s108
  $region4: #{unicl_forward.2} parent=0 // loop_header_branch
    %12 = sbr.rel (%p10) target = $region8
  $region5: #{unicl_forward.2} parent=0 // loop_body
    %s14 = ssub.s32 %s9, 1
    %s15 = ssub.s32 %s9, 2
    %s22 = sadd.s32 1, %s17
    %p23 = scmp.ge.s32.totalorder %s22, 2
    %s24 = scalar_select %p23, 0, %s22
    %s25 = sadd.s32 1, %s16
    %s26 = scalar_select %p23, %s25, %s16
    %p27 = scmp.ge.s32.totalorder %s26, 1
    %s28 = scalar_select %p27, 0, %s26
    %s29 = ssub.s32 %s17, %s24
    %p30 = scmp.eq.s32.totalorder %s29, 0
    %s32 = sadd.s32 %s31, 1
    %s33 = scalar_select %p30, %s31, %s32
    %p36 = pneg %p30
    %p37 = scmp.eq.s32.totalorder %s9, 1
    %p38 = por %p36, %p37
    %p39 = scmp.ne.s32.totalorder %s31, %s34
    %p40 = scmp.eq.s32.totalorder %s9, 0
    %p41 = por %p39, %p40
    %p42 = scmp.ne.s32.totalorder %s31, %s34
    %p43 = scmp.eq.s32.totalorder %s14, 1
    %p44 = por %p42, %p43
    %p45 = scmp.ne.s32.totalorder %s34, %s35
    %p46 = scmp.eq.s32.totalorder %s14, 0
    %p47 = por %p45, %p46
    %p48 = scmp.ne.s32.totalorder %s34, %s35
    %p49 = scmp.eq.s32.totalorder %s15, 1
    %p50 = por %p48, %p49
    %p52 = scmp.ne.s32.totalorder %s35, %s51
    %p53 = scmp.eq.s32.totalorder %s15, 0
    %p54 = por %p52, %p53
    %s55 = ssub.s32 %s16, %s28
    %p56 = scmp.eq.s32.totalorder %s55, 0
    %s58 = sadd.s32 %s57, 1
    %s59 = scalar_select %p56, %s57, %s58
    %p62 = pneg %p56
    %p63 = scmp.eq.s32.totalorder %s9, 1
    %p64 = por %p62, %p63
    %p65 = scmp.ne.s32.totalorder %s57, %s60
    %p66 = scmp.eq.s32.totalorder %s9, 0
    %p67 = por %p65, %p66
    %p68 = scmp.ne.s32.totalorder %s57, %s60
    %p69 = scmp.eq.s32.totalorder %s14, 1
    %p70 = por %p68, %p69
    %p71 = scmp.ne.s32.totalorder %s60, %s61
    %p72 = scmp.eq.s32.totalorder %s14, 0
    %p73 = por %p71, %p72
    %p74 = scmp.ne.s32.totalorder %s60, %s61
    %p75 = scmp.eq.s32.totalorder %s15, 1
    %p76 = por %p74, %p75
    %p78 = scmp.ne.s32.totalorder %s61, %s77
    %p79 = scmp.eq.s32.totalorder %s15, 0
    %p80 = por %p78, %p79
    %s82 = sadd.s32 %s81, 1
    %p85 = scmp.eq.s32.totalorder %s9, 1
    %p86 = scmp.ne.s32.totalorder %s81, %s83
    %p87 = scmp.eq.s32.totalorder %s9, 0
    %p88 = por %p86, %p87
    %p89 = scmp.ne.s32.totalorder %s81, %s83
    %p90 = scmp.eq.s32.totalorder %s14, 1
    %p91 = por %p89, %p90
    %p92 = scmp.ne.s32.totalorder %s83, %s84
    %p93 = scmp.eq.s32.totalorder %s14, 0
    %p94 = por %p92, %p93
    %p95 = scmp.ne.s32.totalorder %s83, %s84
    %p96 = scmp.eq.s32.totalorder %s15, 1
    %p97 = por %p95, %p96
    %p99 = scmp.ne.s32.totalorder %s84, %s98
    %p100 = scmp.eq.s32.totalorder %s15, 0
    %p101 = por %p99, %p100
    %s102 = ssub.s32 %s16, %s28
    %p103 = scmp.eq.s32.totalorder %s102, 0
    %s105 = sadd.s32 %s104, 1
    %s106 = scalar_select %p103, %s104, %s105
    %p109 = pneg %p103
    %p110 = scmp.eq.s32.totalorder %s9, 1
    %p111 = por %p109, %p110
    %p112 = scmp.ne.s32.totalorder %s104, %s107
    %p113 = scmp.eq.s32.totalorder %s9, 0
    %p114 = por %p112, %p113
    %p115 = scmp.ne.s32.totalorder %s104, %s107
    %p116 = scmp.eq.s32.totalorder %s14, 1
    %p117 = por %p115, %p116
    %p118 = scmp.ne.s32.totalorder %s107, %s108
    %p119 = scmp.eq.s32.totalorder %s14, 0
    %p120 = por %p118, %p119
    %p121 = scmp.ne.s32.totalorder %s107, %s108
    %p122 = scmp.eq.s32.totalorder %s15, 1
    %p123 = por %p121, %p122
    %p125 = scmp.ne.s32.totalorder %s108, %s124
    %p126 = scmp.eq.s32.totalorder %s15, 0
    %p127 = por %p125, %p126
    %p128 = scmp.le.s32.totalorder 1, %s9
    %p129 = scmp.lt.s32.totalorder %s9, 3
    %p130 = pnand %p128, %p129
    %p131 = pneg %p130
    // Predicated region
    $region9: #{unicl_forward.2} parent=5 // pred_check
      _
    $region10: #{unicl_forward.2} parent=5 // pred_check_branch
      %133 = sbr.rel (%p130) target = $region12
    $region11: #{unicl_forward.2} parent=5 // pred_region
      %s134 = ssub.s32 %s9, 1
      // Predicated region
      $region13: #{unicl_forward.2} parent=11 // pred_check
        %p135 = pneg %p73
      $region14: #{unicl_forward.2} parent=11 // pred_check_branch
        %137 = sbr.rel (%p135) target = $region16
      $region15: #{unicl_forward.2} parent=11 // pred_region
        %p138 = scmp.lt.s32.totalorder %s18, 0
        %s139 = scalar_select %p138, %s18, 0
        %s140 = smul.addr %s139, 4
        %s141 = scalar_lea.vmem %s1, %s140
      $region16: #{unicl_forward.2} parent=11 // pred_fallthru
        _
      // Predicated region
      $region17: #{unicl_forward.2} parent=11 // pred_check
        %p142 = pneg %p94
      $region18: #{unicl_forward.2} parent=11 // pred_check_branch
        %144 = sbr.rel (%p142) target = $region20
      $region19: #{unicl_forward.2} parent=11 // pred_region
        _
      $region20: #{unicl_forward.2} parent=11 // pred_fallthru
        _
    $region12: #{unicl_forward.2} parent=5 // pred_fallthru
      _
    %p145 = scmp.lt.s32.totalorder %s9, 2
    // Predicated region
    $region21: #{unicl_forward.2} parent=5 // pred_check
      %p146 = pneg %p145
    $region22: #{unicl_forward.2} parent=5 // pred_check_branch
      %148 = sbr.rel (%p146) target = $region24
    $region23: #{unicl_forward.2} parent=5 // pred_region
      // Predicated region
      $region25: #{unicl_forward.2} parent=23 // pred_check
        %p149 = pneg %p41
      $region26: #{unicl_forward.2} parent=23 // pred_check_branch
        %151 = sbr.rel (%p149) target = $region28
      $region27: #{unicl_forward.2} parent=23 // pred_region
        %s152 = smul.u32 2, %s17
        %p153 = scmp.lt.s32.totalorder %s152, 3
        %s154 = scalar_select %p153, %s152, 3
        %s155 = smul.addr %s154, 4
        %s156 = scalar_lea.vmem %s0, %s155
        %s157 = smul.u32 2, %s17
      $region28: #{unicl_forward.2} parent=23 // pred_fallthru
        _
    $region24: #{unicl_forward.2} parent=5 // pred_fallthru
      _
    %p158 = scmp.le.s32.totalorder 1, %s9
    %p159 = scmp.lt.s32.totalorder %s9, 3
    %p160 = pnand %p158, %p159
    %p161 = pneg %p160
    // Predicated region
    $region29: #{unicl_forward.2} parent=5 // pred_check
      _
    $region30: #{unicl_forward.2} parent=5 // pred_check_branch
      %163 = sbr.rel (%p160) target = $region32
    $region31: #{unicl_forward.2} parent=5 // pred_region
      %s164 = ssub.s32 %s9, 1
      %s165 = smul.u32 2, %s19
      %p166 = scmp.lt.s32.totalorder %s165, 3
      %s167 = scalar_select %p166, %s165, 3
      %s168 = smul.addr %s167, 4
      %s169 = scalar_lea.vmem %s0, %s168
      %p170 = pneg %p47
      %p171 = pneg %p44
      %p172 = scmp.lt.s32.totalorder %s18, 0
      %s173 = scalar_select %p172, %s18, 0
      %s174 = smul.addr %s173, 4
      %s175 = scalar_lea.vmem %s1, %s174
      %p176 = pneg %p73
      %p177 = pneg %p70
      %p178 = pneg %p94
      %p179 = pneg %p91
      %p180 = pneg %p120
      %p181 = pneg %p117
      %p182 = scmp.lt.s32.totalorder %s18, 0
      %s183 = scalar_select %p182, %s18, 0
      %s184 = smul.addr %s183, 8
      %s185 = scalar_lea.vmem %s3, %s184
      %s186 = smul.u32 2, %s19
      %p187 = scmp.lt.s32.totalorder %s186, 3
      %s188 = scalar_select %p187, %s186, 3
      %s189 = smul.addr %s188, 4
      %s190 = scalar_lea.vmem %s0, %s189
      %s191 = smul.u32 2, %s19
      %p192 = scmp.lt.s32.totalorder %s18, 0
      %s193 = scalar_select %p192, %s18, 0
      %s194 = smul.addr %s193, 4
      %s195 = scalar_lea.vmem %s1, %s194
      %p196 = scmp.lt.s32.totalorder %s18, 0
      %s197 = scalar_select %p196, %s18, 0
      %s198 = smul.addr %s197, 8
      %s199 = scalar_lea.vmem %s3, %s198
      %p205 = scmp.eq.s32.totalorder %s19, 0
      // Predicated region
      $region33: #{unicl_forward.2} parent=31 // pred_check
        %p206 = pneg %p205
      $region34: #{unicl_forward.2} parent=31 // pred_check_branch
        %208 = sbr.rel (%p206) target = $region36
      $region35: #{unicl_forward.2} parent=31 // pred_region
        %209 = vst [vmem:[%s199] sm:$0xff] 0.0
      $region36: #{unicl_forward.2} parent=31 // pred_fallthru
        _
      %v210 = vld [vmem:[%s190] sm:$0xf]
      %v211 = vld [vmem:[%s190 + $0x4] sm:$0xf]
      %v212 = vld [vmem:[%s195] sm:$0xf]
      %v213 = vld [vmem:[%s195 + $0x4] sm:$0xf]
      %v214 = vld [vmem:[%s195 + $0x8] sm:$0xf]
      %v215 = vld [vmem:[%s195 + $0xc] sm:$0xf]
      %v216 = vld [vmem:[%s195 + $0x10] sm:$0xf]
      %v217 = vld [vmem:[%s195 + $0x14] sm:$0xf]
      %v218 = vld [vmem:[%s195 + $0x18] sm:$0xf]
      %v219 = vld [vmem:[%s195 + $0x1c] sm:$0xf]
      %v220 = vld [vmem:[%s195 + $0x20] sm:$0xf]
      %v221 = vld [vmem:[%s195 + $0x24] sm:$0xf]
      %v222 = vld [vmem:[%s195 + $0x28] sm:$0xf]
      %v223 = vld [vmem:[%s195 + $0x2c] sm:$0xf]
      %v224 = vld [vmem:[%s195 + $0x30] sm:$0xf]
      %v225 = vld [vmem:[%s195 + $0x34] sm:$0xf]
      %v226 = vld [vmem:[%s195 + $0x38] sm:$0xf]
      %v227 = vld [vmem:[%s195 + $0x3c] sm:$0xf]
      %v230 = vunpack.c.l.b16 %v210
      %v231 = vunpack.c.l.b16 %v211
      %v232 = vpack.c.b16 %v231, %v230
      %v250 = vunpack.c.l.b16 %v212
      %v251 = vunpack.c.l.b16 %v213
      %v252 = vunpack.c.l.b16 %v214
      %v253 = vunpack.c.l.b16 %v215
      %v254 = vunpack.c.l.b16 %v216
      %v255 = vunpack.c.l.b16 %v217
      %v256 = vunpack.c.l.b16 %v218
      %v257 = vunpack.c.l.b16 %v219
      %v258 = vunpack.c.l.b16 %v220
      %v259 = vunpack.c.l.b16 %v221
      %v260 = vunpack.c.l.b16 %v222
      %v261 = vunpack.c.l.b16 %v223
      %v262 = vunpack.c.l.b16 %v224
      %v263 = vunpack.c.l.b16 %v225
      %v264 = vunpack.c.l.b16 %v226
      %v265 = vunpack.c.l.b16 %v227
      %v266 = vpack.c.b16 %v251, %v250
      %v267 = vpack.c.b16 %v253, %v252
      %v268 = vpack.c.b16 %v255, %v254
      %v269 = vpack.c.b16 %v257, %v256
      %v270 = vpack.c.b16 %v259, %v258
      %v271 = vpack.c.b16 %v261, %v260
      %v272 = vpack.c.b16 %v263, %v262
      %v273 = vpack.c.b16 %v265, %v264
      %282 = vmatprep.subr.bf16.mxu0 0
      %283 = vmatpush1.bf16.msra.mxu0 %v266
      %284 = vmatprep.subr.bf16.mxu0 0
      %285 = vmatpush1.bf16.msra.mxu0 %v267
      %286 = vmatprep.subr.bf16.mxu0 0
      %287 = vmatpush1.bf16.msra.mxu0 %v268
      %288 = vmatprep.subr.bf16.mxu0 0
      %289 = vmatpush1.bf16.msra.mxu0 %v269
      %290 = vmatprep.subr.bf16.mxu0 0
      %291 = vmatpush1.bf16.msra.mxu0 %v270
      %292 = vmatprep.subr.bf16.mxu0 0
      %293 = vmatpush1.bf16.msra.mxu0 %v271
      %294 = vmatprep.subr.bf16.mxu0 0
      %295 = vmatpush1.bf16.msra.mxu0 %v272
      %296 = vmatprep.subr.bf16.mxu0 0
      %297 = vmatpush1.bf16.msra.mxu0 %v273
      %298 = vmatprep.subr.bf16.mxu0 0
      %299 = vmatpush1.bf16.msra.mxu0 0
      %300 = vmatprep.subr.bf16.mxu0 0
      %301 = vmatpush1.bf16.msra.mxu0 0
      %302 = vmatprep.subr.bf16.mxu0 0
      %303 = vmatpush1.bf16.msra.mxu0 0
      %304 = vmatprep.subr.bf16.mxu0 0
      %305 = vmatpush1.bf16.msra.mxu0 0
      %306 = vmatprep.subr.bf16.mxu0 0
      %307 = vmatpush1.bf16.msra.mxu0 0
      %308 = vmatprep.subr.bf16.mxu0 0
      %309 = vmatpush1.bf16.msra.mxu0 0
      %310 = vmatprep.subr.bf16.mxu0 0
      %311 = vmatpush1.bf16.msra.mxu0 0
      %312 = vmatprep.subr.bf16.mxu0 0
      %313 = vmatpush1.bf16.msra.mxu0 0
      %314 = vmatprep.mubr.bf16.mxu0 0
      %315 = vmatmul.mubr.bf16.gmra.mrb[0].mxu0 %v232
      %v316 = vpop.f32.mrb[0].mxu0
      %v317 = vadd.f32 0.0, %v316
      %v318 = vpop.f32.mrb[0].mxu0
      %v319 = vpop.f32.mrb[0].mxu0
      %v320 = vadd.f32 0.0, %v319
      %v321 = vpop.f32.mrb[0].mxu0
      %322 = vdwg.mxu0
      %v323 = vpack.c.bf16 %v320, %v317
      %v324 = vmul.bf16 %v323, 1056980736
      %v325 = vmul.bf16 %v323, 1027030327
      %v326 = vmul.bf16 %v325, %v323
      %v327 = vmul.bf16 %v326, %v323
      %v328 = vadd.bf16 %v323, %v327
      %v329 = vmul.bf16 %v328, 1061961548
      %v330 = vtanh.bf16.pop %v329
      %v331 = vadd.bf16 %v330, 1065369472
      %v332 = vmul.bf16 %v324, %v331
      %v333 = vld [vmem:[%s199] sm:$0xff]
      %v334 = vld [vmem:[%s2] sm:$0xf]
      %vm335 = vcmask 130048
      %v337 = vsel %vm335, %v334, 0
      %339 = vmatprep.subr.bf16.mxu0 0
      %340 = vmatpush1.bf16.msra.mxu0 %v332
      %341 = vmatprep.subr.bf16.mxu0 0
      %342 = vmatpush1.bf16.msra.mxu0 0
      %343 = vmatprep.subr.bf16.mxu0 0
      %344 = vmatpush1.bf16.msra.mxu0 0
      %345 = vmatprep.subr.bf16.mxu0 0
      %346 = vmatpush1.bf16.msra.mxu0 0
      %347 = vmatprep.subr.bf16.mxu0 0
      %348 = vmatpush1.bf16.msra.mxu0 0
      %349 = vmatprep.subr.bf16.mxu0 0
      %350 = vmatpush1.bf16.msra.mxu0 0
      %351 = vmatprep.subr.bf16.mxu0 0
      %352 = vmatpush1.bf16.msra.mxu0 0
      %353 = vmatprep.subr.bf16.mxu0 0
      %354 = vmatpush1.bf16.msra.mxu0 0
      %355 = vmatprep.subr.bf16.mxu0 0
      %356 = vmatpush1.bf16.msra.mxu0 0
      %357 = vmatprep.subr.bf16.mxu0 0
      %358 = vmatpush1.bf16.msra.mxu0 0
      %359 = vmatprep.subr.bf16.mxu0 0
      %360 = vmatpush1.bf16.msra.mxu0 0
      %361 = vmatprep.subr.bf16.mxu0 0
      %362 = vmatpush1.bf16.msra.mxu0 0
      %363 = vmatprep.subr.bf16.mxu0 0
      %364 = vmatpush1.bf16.msra.mxu0 0
      %365 = vmatprep.subr.bf16.mxu0 0
      %366 = vmatpush1.bf16.msra.mxu0 0
      %367 = vmatprep.subr.bf16.mxu0 0
      %368 = vmatpush1.bf16.msra.mxu0 0
      %369 = vmatprep.subr.bf16.mxu0 0
      %370 = vmatpush1.bf16.msra.mxu0 0
      %371 = vmatprep.mubr.bf16.mxu0 0
      %372 = vmatmul.mubr.bf16.gmra.mrb[0].mxu0 %v337
      %v373 = vpop.f32.mrb[0].mxu0
      %v374 = vadd.f32 0.0, %v373
      %v375 = vpop.f32.mrb[0].mxu0
      %v376 = vpop.f32.mrb[0].mxu0
      %v377 = vpop.f32.mrb[0].mxu0
      %378 = vdwg.mxu0
      %v379 = vadd.f32 %v333, %v374
      %380 = vst [vmem:[%s199] sm:$0xff] %v379
      %p381 = scmp.lt.s32.totalorder %s18, 0
      %s382 = scalar_select %p381, %s18, 0
      %s383 = smul.addr %s382, 8
      %s384 = scalar_lea.vmem %s3, %s383
      // Predicated region
      $region37: #{unicl_forward.2} parent=31 // pred_check
        %p385 = pneg %p117
      $region38: #{unicl_forward.2} parent=31 // pred_check_branch
        %387 = sbr.rel (%p385) target = $region40
      $region39: #{unicl_forward.2} parent=31 // pred_region
        _
      $region40: #{unicl_forward.2} parent=31 // pred_fallthru
        _
      // Predicated region
      $region41: #{unicl_forward.2} parent=31 // pred_check
        %p388 = pneg %p117
      $region42: #{unicl_forward.2} parent=31 // pred_check_branch
        %390 = sbr.rel (%p388) target = $region44
      $region43: #{unicl_forward.2} parent=31 // pred_region
        %p391 = scmp.lt.s32.totalorder %s18, 0
        %s392 = scalar_select %p391, %s18, 0
        %s393 = smul.addr %s392, 8
        %s394 = scalar_lea.vmem %s3, %s393
      $region44: #{unicl_forward.2} parent=31 // pred_fallthru
        _
    $region32: #{unicl_forward.2} parent=5 // pred_fallthru
      _
    %p395 = scmp.le.s32.totalorder 2, %s9
    // Predicated region
    $region45: #{unicl_forward.2} parent=5 // pred_check
      %p396 = pneg %p395
    $region46: #{unicl_forward.2} parent=5 // pred_check_branch
      %398 = sbr.rel (%p396) target = $region48
    $region47: #{unicl_forward.2} parent=5 // pred_region
      %s399 = ssub.s32 %s9, 2
    $region48: #{unicl_forward.2} parent=5 // pred_fallthru
      _
  $region6: #{unicl_forward.2} parent=0 // loop_footer
    %s13 = sadd.s32 1, %s9
  $region7: #{unicl_forward.2} parent=0 // loop_footer_branch
    %8 = sbr.rel target = $region3
  $region8: #{unicl_forward.2} parent=0 // loop_exit
    _

</llo_original>
